<compile_context>
chip_gen: v7x
topology: tpu7x:2x2x1
jax: 0.10.0
libtpu: 0.0.40
codegen_flags: <defaults>
</compile_context>

<pallas_src>
import jax
import jax.numpy as jnp
import numpy as np
from jax.experimental import pallas as pl
from jax.experimental.pallas import tpu as pltpu

NEG_SLOPE = 0.3
BN_EPS = 1e-5


# ----------------------------- fused Pallas kernel -------------------------- #

def _make_resblock_kernel(H, W, C):
    HW = H * W
    # flattened-index displacement of each of the 9 taps (kh, kw)
    disp = [(kh - 1) * W + (kw - 1) for kh in range(3) for kw in range(3)]

    def kernel(mask_ref, x_ref, w1t_ref, b1_ref, w2t_ref, b2_ref, o_ref, col_ref):
        # mask_ref : (9, HW)        per-tap {0,1} boundary masks
        # x_ref    : (1, C, HW)     one image, channel-major (H*W on the lane axis)
        # w*t_ref  : (C, 9*C)       conv weights (BN scale folded), transposed im2col layout
        # b*_ref   : (C, 1)         folded eval-mode BatchNorm bias
        # o_ref    : (1, C, HW)     output block (NCHW flattened -> lane-dense)
        # col_ref  : VMEM (9*C, HW) transposed im2col matrix (reused by both convs)
        x = x_ref[0]                                          # (C, HW)

        def fill_cols(act):
            # colT[t*C:(t+1)*C, p] = act[:, p + disp[t]]  (0 outside the image).
            # The roll wraps in flattened index space; every wrapped / cross-row
            # position is exactly one that the boundary mask zeroes out.
            for t, d in enumerate(disp):
                rolled = act if d == 0 else pltpu.roll(act, shift=(-d) % HW, axis=1)
                col_ref[t * C:(t + 1) * C, :] = rolled * mask_ref[t:t + 1, :]

        def conv_bias(wt_ref, b_ref):
            # single MXU matmul, K = 9*C, output lane dim = HW (full lane width)
            return jnp.dot(wt_ref[...], col_ref[...],
                           preferred_element_type=jnp.float32) + b_ref[...]

        # ---- conv1 + bn1 + LeakyReLU(0.3) ----
        fill_cols(x)
        h = conv_bias(w1t_ref, b1_ref)                        # (C, HW)
        h = jnp.where(h >= 0, h, NEG_SLOPE * h)

        # ---- conv2 + bn2 + residual add + LeakyReLU(0.3) ----
        fill_cols(h)
        y = conv_bias(w2t_ref, b2_ref) + x                    # (C, HW)
        y = jnp.where(y >= 0, y, NEG_SLOPE * y)

        o_ref[0] = y.astype(o_ref.dtype)

    return kernel


def _tap_masks(H, W):
    """{0,1} masks: mask[t, h*W+w] = 1 iff (h+kh-1, w+kw-1) is inside the image."""
    m = np.ones((9, H, W), np.float32)
    for kh in range(3):
        for kw in range(3):
            t = kh * 3 + kw
            if kh == 0:
                m[t, 0, :] = 0.0
            if kh == 2:
                m[t, H - 1, :] = 0.0
            if kw == 0:
                m[t, :, 0] = 0.0
            if kw == 2:
                m[t, :, W - 1] = 0.0
    return m.reshape(9, H * W)


def residual_block_forward(x_nchw, params):
    """x_nchw: (N, C, H, W) float32. Returns (N, C, H, W) matching PyTorch."""
    N, C, H, W = x_nchw.shape
    HW = H * W
    x = x_nchw.reshape(N, C, HW).astype(jnp.float32)          # channel-major, no transpose

    def fold_weight(w_hwio, scale):
        # fold BN scale into output channels, then lay out as (C_out, 9*C_in):
        # wT[cout, (kh*3+kw)*C + cin] = w[kh, kw, cin, cout] * scale[cout]
        wf = (w_hwio * scale.reshape(1, 1, 1, C)).reshape(9 * C, C)
        return jnp.transpose(wf, (1, 0)).astype(jnp.float32)

    w1t = fold_weight(params["w1"], params["scale1"])
    w2t = fold_weight(params["w2"], params["scale2"])
    b1 = params["bias1"].reshape(C, 1).astype(jnp.float32)
    b2 = params["bias2"].reshape(C, 1).astype(jnp.float32)
    masks = jnp.asarray(_tap_masks(H, W))

    out = pl.pallas_call(
        _make_resblock_kernel(H, W, C),
        out_shape=jax.ShapeDtypeStruct((N, C, HW), jnp.float32),
        grid=(N,),
        in_specs=[
            pl.BlockSpec((9, HW), lambda n: (0, 0)),          # tap masks (resident)
            pl.BlockSpec((1, C, HW), lambda n: (n, 0, 0)),    # x
            pl.BlockSpec((C, 9 * C), lambda n: (0, 0)),       # w1 (BN1 scale folded)
            pl.BlockSpec((C, 1), lambda n: (0, 0)),           # bn1 bias
            pl.BlockSpec((C, 9 * C), lambda n: (0, 0)),       # w2 (BN2 scale folded)
            pl.BlockSpec((C, 1), lambda n: (0, 0)),           # bn2 bias
        ],
        out_specs=pl.BlockSpec((1, C, HW), lambda n: (n, 0, 0)),
        scratch_shapes=[pltpu.VMEM((9 * C, HW), jnp.float32)],   # im2col^T, ~144 KB @ C=16
        compiler_params=pltpu.CompilerParams(
            dimension_semantics=("parallel",)),                  # batch shards across TCs
    )(masks, x, w1t, b1, w2t, b2)

    return out.reshape(N, C, H, W)                            # (N, C, HW) is NCHW flattened


# --------------------------- parameter creation ------------------------------ #

def _bn_fold(key, c):
    k1, k2, k3, k4 = jax.random.split(key, 4)
    gamma = 1.0 + 0.1 * jax.random.normal(k1, (c,), jnp.float32)
    beta = 0.1 * jax.random.normal(k2, (c,), jnp.float32)
    mean = 0.05 * jax.random.normal(k3, (c,), jnp.float32)
    var = jax.random.uniform(k4, (c,), jnp.float32, minval=0.5, maxval=1.5)
    scale = gamma / jnp.sqrt(var + BN_EPS)
    bias = beta - mean * scale
    return scale, bias


def _conv_w(key, cin, cout):
    fan_in = cin * 9
    return jax.random.normal(key, (3, 3, cin, cout), jnp.float32) / np.sqrt(fan_in)


def init_params(key, channels):
    k1, k2, kb1, kb2 = jax.random.split(key, 4)
    s1, b1 = _bn_fold(kb1, channels)
    s2, b2 = _bn_fold(kb2, channels)
    return {"w1": _conv_w(k1, channels, channels), "scale1": s1, "bias1": b1,
            "w2": _conv_w(k2, channels, channels), "scale2": s2, "bias2": b2}


# ----------------------------- pure-JAX reference ---------------------------- #

def _ref_conv(x, w):
    return jax.lax.conv_general_dilated(
        x, w, (1, 1), ((1, 1), (1, 1)),
        dimension_numbers=("NHWC", "HWIO", "NHWC"))


def _leaky(x):
    return jnp.where(x >= 0, x, NEG_SLOPE * x)


def residual_block_reference(x_nchw, params):
    x = jnp.transpose(x_nchw, (0, 2, 3, 1)).astype(jnp.float32)
    h = _leaky(_ref_conv(x, params["w1"]) * params["scale1"] + params["bias1"])
    y = _leaky(_ref_conv(h, params["w2"]) * params["scale2"] + params["bias2"] + x)
    return jnp.transpose(y, (0, 3, 1, 2))


# ---------------------------------- main -------------------------------------- #

if __name__ == "__main__":
    key = jax.random.PRNGKey(0)
    N, C, H, W = 2, 16, 16, 16

    kx, kp = jax.random.split(key)
    x = jax.random.normal(kx, (N, C, H, W), jnp.float32)   # NCHW, PyTorch convention
    params = init_params(kp, C)

    fwd = jax.jit(residual_block_forward)
    out = jax.block_until_ready(fwd(x, params))
    ref = jax.block_until_ready(residual_block_reference(x, params))

    assert out.shape == (N, C, H, W), out.shape
    np.testing.assert_allclose(np.asarray(out), np.asarray(ref),
                               rtol=1e-4, atol=1e-4)
    print("KERNEL_OK")
</pallas_src>

<mosaic_0001>
module attributes {stable_mosaic.version = 11 : i64} {
  func.func @kernel(%arg0: i32, %arg1: memref<9x256xf32, #tpu.memory_space<vmem>>, %arg2: memref<1x16x256xf32, #tpu.memory_space<vmem>>, %arg3: memref<16x144xf32, #tpu.memory_space<vmem>>, %arg4: memref<16x1xf32, #tpu.memory_space<vmem>>, %arg5: memref<16x144xf32, #tpu.memory_space<vmem>>, %arg6: memref<16x1xf32, #tpu.memory_space<vmem>>, %arg7: memref<1x16x256xf32, #tpu.memory_space<vmem>>, %arg8: memref<144x256xf32, #tpu.memory_space<vmem>>) attributes {dimension_semantics = [#tpu.dimension_semantics<parallel>], iteration_bounds = array<i64: 2>, scalar_prefetch = 0 : i64, scratch_operands = 1 : i64, tpu.core_type = #tpu.core_type<tc>, window_params = [{pipeline_mode = #tpu.pipeline_mode<synchronous>, transform_indices = @transform_0, window_bounds = array<i64: 9, 256>}, {transform_indices = @transform_1, window_bounds = array<i64: 1, 16, 256>}, {pipeline_mode = #tpu.pipeline_mode<synchronous>, transform_indices = @transform_2, window_bounds = array<i64: 16, 144>}, {pipeline_mode = #tpu.pipeline_mode<synchronous>, transform_indices = @transform_3, window_bounds = array<i64: 16, 1>}, {pipeline_mode = #tpu.pipeline_mode<synchronous>, transform_indices = @transform_4, window_bounds = array<i64: 16, 144>}, {pipeline_mode = #tpu.pipeline_mode<synchronous>, transform_indices = @transform_5, window_bounds = array<i64: 16, 1>}, {transform_indices = @transform_6, window_bounds = array<i64: 1, 16, 256>}]} {
    %c0 = arith.constant 0 : index
    %c0_0 = arith.constant 0 : index
    %c0_1 = arith.constant 0 : index
    %0 = vector.load %arg2[%c0, %c0_0, %c0_1] : memref<1x16x256xf32, #tpu.memory_space<vmem>>, vector<1x16x256xf32>
    %1 = vector.shape_cast %0 : vector<1x16x256xf32> to vector<16x256xf32>
    %c17_i32 = arith.constant 17 : i32
    %2 = tpu.dynamic_rotate %1 by %c17_i32 dim 1 : vector<16x256xf32>, i32 -> vector<16x256xf32>
    %c0_2 = arith.constant 0 : index
    %c0_3 = arith.constant 0 : index
    %3 = vector.load %arg1[%c0_2, %c0_3] : memref<9x256xf32, #tpu.memory_space<vmem>>, vector<1x256xf32>
    %4 = vector.broadcast %3 : vector<1x256xf32> to vector<16x256xf32>
    %5 = arith.mulf %2, %4 : vector<16x256xf32>
    %c0_4 = arith.constant 0 : index
    %c0_5 = arith.constant 0 : index
    %6 = vector.load %arg8[%c0_4, %c0_5] : memref<144x256xf32, #tpu.memory_space<vmem>>, vector<16x256xf32>
    tpu.vector_store %arg8[%c0_4, %c0_5], %5 {strides = array<i32>} : memref<144x256xf32, #tpu.memory_space<vmem>>, vector<16x256xf32>,
    %c16_i32 = arith.constant 16 : i32
    %7 = tpu.dynamic_rotate %1 by %c16_i32 dim 1 : vector<16x256xf32>, i32 -> vector<16x256xf32>
    %c1 = arith.constant 1 : index
    %c0_6 = arith.constant 0 : index
    %8 = vector.load %arg1[%c1, %c0_6] : memref<9x256xf32, #tpu.memory_space<vmem>>, vector<1x256xf32>
    %9 = vector.broadcast %8 : vector<1x256xf32> to vector<16x256xf32>
    %10 = arith.mulf %7, %9 : vector<16x256xf32>
    %c16 = arith.constant 16 : index
    %c0_7 = arith.constant 0 : index
    %11 = vector.load %arg8[%c16, %c0_7] : memref<144x256xf32, #tpu.memory_space<vmem>>, vector<16x256xf32>
    tpu.vector_store %arg8[%c16, %c0_7], %10 {strides = array<i32>} : memref<144x256xf32, #tpu.memory_space<vmem>>, vector<16x256xf32>,
    %c15_i32 = arith.constant 15 : i32
    %12 = tpu.dynamic_rotate %1 by %c15_i32 dim 1 : vector<16x256xf32>, i32 -> vector<16x256xf32>
    %c2 = arith.constant 2 : index
    %c0_8 = arith.constant 0 : index
    %13 = vector.load %arg1[%c2, %c0_8] : memref<9x256xf32, #tpu.memory_space<vmem>>, vector<1x256xf32>
    %14 = vector.broadcast %13 : vector<1x256xf32> to vector<16x256xf32>
    %15 = arith.mulf %12, %14 : vector<16x256xf32>
    %c32 = arith.constant 32 : index
    %c0_9 = arith.constant 0 : index
    %16 = vector.load %arg8[%c32, %c0_9] : memref<144x256xf32, #tpu.memory_space<vmem>>, vector<16x256xf32>
    tpu.vector_store %arg8[%c32, %c0_9], %15 {strides = array<i32>} : memref<144x256xf32, #tpu.memory_space<vmem>>, vector<16x256xf32>,
    %c1_i32 = arith.constant 1 : i32
    %17 = tpu.dynamic_rotate %1 by %c1_i32 dim 1 : vector<16x256xf32>, i32 -> vector<16x256xf32>
    %c3 = arith.constant 3 : index
    %c0_10 = arith.constant 0 : index
    %18 = vector.load %arg1[%c3, %c0_10] : memref<9x256xf32, #tpu.memory_space<vmem>>, vector<1x256xf32>
    %19 = vector.broadcast %18 : vector<1x256xf32> to vector<16x256xf32>
    %20 = arith.mulf %17, %19 : vector<16x256xf32>
    %c48 = arith.constant 48 : index
    %c0_11 = arith.constant 0 : index
    %21 = vector.load %arg8[%c48, %c0_11] : memref<144x256xf32, #tpu.memory_space<vmem>>, vector<16x256xf32>
    tpu.vector_store %arg8[%c48, %c0_11], %20 {strides = array<i32>} : memref<144x256xf32, #tpu.memory_space<vmem>>, vector<16x256xf32>,
    %c4 = arith.constant 4 : index
    %c0_12 = arith.constant 0 : index
    %22 = vector.load %arg1[%c4, %c0_12] : memref<9x256xf32, #tpu.memory_space<vmem>>, vector<1x256xf32>
    %23 = vector.broadcast %22 : vector<1x256xf32> to vector<16x256xf32>
    %24 = arith.mulf %1, %23 : vector<16x256xf32>
    %c64 = arith.constant 64 : index
    %c0_13 = arith.constant 0 : index
    %25 = vector.load %arg8[%c64, %c0_13] : memref<144x256xf32, #tpu.memory_space<vmem>>, vector<16x256xf32>
    tpu.vector_store %arg8[%c64, %c0_13], %24 {strides = array<i32>} : memref<144x256xf32, #tpu.memory_space<vmem>>, vector<16x256xf32>,
    %c255_i32 = arith.constant 255 : i32
    %26 = tpu.dynamic_rotate %1 by %c255_i32 dim 1 : vector<16x256xf32>, i32 -> vector<16x256xf32>
    %c5 = arith.constant 5 : index
    %c0_14 = arith.constant 0 : index
    %27 = vector.load %arg1[%c5, %c0_14] : memref<9x256xf32, #tpu.memory_space<vmem>>, vector<1x256xf32>
    %28 = vector.broadcast %27 : vector<1x256xf32> to vector<16x256xf32>
    %29 = arith.mulf %26, %28 : vector<16x256xf32>
    %c80 = arith.constant 80 : index
    %c0_15 = arith.constant 0 : index
    %30 = vector.load %arg8[%c80, %c0_15] : memref<144x256xf32, #tpu.memory_space<vmem>>, vector<16x256xf32>
    tpu.vector_store %arg8[%c80, %c0_15], %29 {strides = array<i32>} : memref<144x256xf32, #tpu.memory_space<vmem>>, vector<16x256xf32>,
    %c241_i32 = arith.constant 241 : i32
    %31 = tpu.dynamic_rotate %1 by %c241_i32 dim 1 : vector<16x256xf32>, i32 -> vector<16x256xf32>
    %c6 = arith.constant 6 : index
    %c0_16 = arith.constant 0 : index
    %32 = vector.load %arg1[%c6, %c0_16] : memref<9x256xf32, #tpu.memory_space<vmem>>, vector<1x256xf32>
    %33 = vector.broadcast %32 : vector<1x256xf32> to vector<16x256xf32>
    %34 = arith.mulf %31, %33 : vector<16x256xf32>
    %c96 = arith.constant 96 : index
    %c0_17 = arith.constant 0 : index
    %35 = vector.load %arg8[%c96, %c0_17] : memref<144x256xf32, #tpu.memory_space<vmem>>, vector<16x256xf32>
    tpu.vector_store %arg8[%c96, %c0_17], %34 {strides = array<i32>} : memref<144x256xf32, #tpu.memory_space<vmem>>, vector<16x256xf32>,
    %c240_i32 = arith.constant 240 : i32
    %36 = tpu.dynamic_rotate %1 by %c240_i32 dim 1 : vector<16x256xf32>, i32 -> vector<16x256xf32>
    %c7 = arith.constant 7 : index
    %c0_18 = arith.constant 0 : index
    %37 = vector.load %arg1[%c7, %c0_18] : memref<9x256xf32, #tpu.memory_space<vmem>>, vector<1x256xf32>
    %38 = vector.broadcast %37 : vector<1x256xf32> to vector<16x256xf32>
    %39 = arith.mulf %36, %38 : vector<16x256xf32>
    %c112 = arith.constant 112 : index
    %c0_19 = arith.constant 0 : index
    %40 = vector.load %arg8[%c112, %c0_19] : memref<144x256xf32, #tpu.memory_space<vmem>>, vector<16x256xf32>
    tpu.vector_store %arg8[%c112, %c0_19], %39 {strides = array<i32>} : memref<144x256xf32, #tpu.memory_space<vmem>>, vector<16x256xf32>,
    %c239_i32 = arith.constant 239 : i32
    %41 = tpu.dynamic_rotate %1 by %c239_i32 dim 1 : vector<16x256xf32>, i32 -> vector<16x256xf32>
    %c8 = arith.constant 8 : index
    %c0_20 = arith.constant 0 : index
    %42 = vector.load %arg1[%c8, %c0_20] : memref<9x256xf32, #tpu.memory_space<vmem>>, vector<1x256xf32>
    %43 = vector.broadcast %42 : vector<1x256xf32> to vector<16x256xf32>
    %44 = arith.mulf %41, %43 : vector<16x256xf32>
    %c128 = arith.constant 128 : index
    %c0_21 = arith.constant 0 : index
    %45 = vector.load %arg8[%c128, %c0_21] : memref<144x256xf32, #tpu.memory_space<vmem>>, vector<16x256xf32>
    tpu.vector_store %arg8[%c128, %c0_21], %44 {strides = array<i32>} : memref<144x256xf32, #tpu.memory_space<vmem>>, vector<16x256xf32>,
    %c0_22 = arith.constant 0 : index
    %c0_23 = arith.constant 0 : index
    %46 = vector.load %arg3[%c0_22, %c0_23] : memref<16x144xf32, #tpu.memory_space<vmem>>, vector<16x144xf32>
    %c0_24 = arith.constant 0 : index
    %c0_25 = arith.constant 0 : index
    %47 = vector.load %arg8[%c0_24, %c0_25] : memref<144x256xf32, #tpu.memory_space<vmem>>, vector<144x256xf32>
    %cst = arith.constant dense<0.000000e+00> : vector<16x256xf32>
    %48 = tpu.matmul %46, %47, %cst {dimension_numbers = #tpu.dot_dimension_numbers<[1], [0], [0], [1], [0, 0, 1, 1], [], []>} : vector<16x144xf32>, vector<144x256xf32>, vector<16x256xf32> -> vector<16x256xf32>
    %c0_26 = arith.constant 0 : index
    %c0_27 = arith.constant 0 : index
    %49 = vector.load %arg4[%c0_26, %c0_27] : memref<16x1xf32, #tpu.memory_space<vmem>>, vector<16x1xf32>
    %50 = vector.broadcast %49 : vector<16x1xf32> to vector<16x256xf32>
    %51 = arith.addf %48, %50 : vector<16x256xf32>
    %cst_28 = arith.constant 0.000000e+00 : f32
    %52 = vector.broadcast %cst_28 : f32 to vector<16x256xf32>
    %53 = arith.cmpf oge, %51, %52 : vector<16x256xf32>
    %cst_29 = arith.constant 3.000000e-01 : f32
    %54 = vector.broadcast %cst_29 : f32 to vector<16x256xf32>
    %55 = arith.mulf %54, %51 : vector<16x256xf32>
    %56 = arith.select %53, %51, %55 : vector<16x256xi1>, vector<16x256xf32>
    %c17_i32_30 = arith.constant 17 : i32
    %57 = tpu.dynamic_rotate %56 by %c17_i32_30 dim 1 : vector<16x256xf32>, i32 -> vector<16x256xf32>
    %c0_31 = arith.constant 0 : index
    %c0_32 = arith.constant 0 : index
    %58 = vector.load %arg1[%c0_31, %c0_32] : memref<9x256xf32, #tpu.memory_space<vmem>>, vector<1x256xf32>
    %59 = vector.broadcast %58 : vector<1x256xf32> to vector<16x256xf32>
    %60 = arith.mulf %57, %59 : vector<16x256xf32>
    %c0_33 = arith.constant 0 : index
    %c0_34 = arith.constant 0 : index
    %61 = vector.load %arg8[%c0_33, %c0_34] : memref<144x256xf32, #tpu.memory_space<vmem>>, vector<16x256xf32>
    tpu.vector_store %arg8[%c0_33, %c0_34], %60 {strides = array<i32>} : memref<144x256xf32, #tpu.memory_space<vmem>>, vector<16x256xf32>,
    %c16_i32_35 = arith.constant 16 : i32
    %62 = tpu.dynamic_rotate %56 by %c16_i32_35 dim 1 : vector<16x256xf32>, i32 -> vector<16x256xf32>
    %c1_36 = arith.constant 1 : index
    %c0_37 = arith.constant 0 : index
    %63 = vector.load %arg1[%c1_36, %c0_37] : memref<9x256xf32, #tpu.memory_space<vmem>>, vector<1x256xf32>
    %64 = vector.broadcast %63 : vector<1x256xf32> to vector<16x256xf32>
    %65 = arith.mulf %62, %64 : vector<16x256xf32>
    %c16_38 = arith.constant 16 : index
    %c0_39 = arith.constant 0 : index
    %66 = vector.load %arg8[%c16_38, %c0_39] : memref<144x256xf32, #tpu.memory_space<vmem>>, vector<16x256xf32>
    tpu.vector_store %arg8[%c16_38, %c0_39], %65 {strides = array<i32>} : memref<144x256xf32, #tpu.memory_space<vmem>>, vector<16x256xf32>,
    %c15_i32_40 = arith.constant 15 : i32
    %67 = tpu.dynamic_rotate %56 by %c15_i32_40 dim 1 : vector<16x256xf32>, i32 -> vector<16x256xf32>
    %c2_41 = arith.constant 2 : index
    %c0_42 = arith.constant 0 : index
    %68 = vector.load %arg1[%c2_41, %c0_42] : memref<9x256xf32, #tpu.memory_space<vmem>>, vector<1x256xf32>
    %69 = vector.broadcast %68 : vector<1x256xf32> to vector<16x256xf32>
    %70 = arith.mulf %67, %69 : vector<16x256xf32>
    %c32_43 = arith.constant 32 : index
    %c0_44 = arith.constant 0 : index
    %71 = vector.load %arg8[%c32_43, %c0_44] : memref<144x256xf32, #tpu.memory_space<vmem>>, vector<16x256xf32>
    tpu.vector_store %arg8[%c32_43, %c0_44], %70 {strides = array<i32>} : memref<144x256xf32, #tpu.memory_space<vmem>>, vector<16x256xf32>,
    %c1_i32_45 = arith.constant 1 : i32
    %72 = tpu.dynamic_rotate %56 by %c1_i32_45 dim 1 : vector<16x256xf32>, i32 -> vector<16x256xf32>
    %c3_46 = arith.constant 3 : index
    %c0_47 = arith.constant 0 : index
    %73 = vector.load %arg1[%c3_46, %c0_47] : memref<9x256xf32, #tpu.memory_space<vmem>>, vector<1x256xf32>
    %74 = vector.broadcast %73 : vector<1x256xf32> to vector<16x256xf32>
    %75 = arith.mulf %72, %74 : vector<16x256xf32>
    %c48_48 = arith.constant 48 : index
    %c0_49 = arith.constant 0 : index
    %76 = vector.load %arg8[%c48_48, %c0_49] : memref<144x256xf32, #tpu.memory_space<vmem>>, vector<16x256xf32>
    tpu.vector_store %arg8[%c48_48, %c0_49], %75 {strides = array<i32>} : memref<144x256xf32, #tpu.memory_space<vmem>>, vector<16x256xf32>,
    %c4_50 = arith.constant 4 : index
    %c0_51 = arith.constant 0 : index
    %77 = vector.load %arg1[%c4_50, %c0_51] : memref<9x256xf32, #tpu.memory_space<vmem>>, vector<1x256xf32>
    %78 = vector.broadcast %77 : vector<1x256xf32> to vector<16x256xf32>
    %79 = arith.mulf %56, %78 : vector<16x256xf32>
    %c64_52 = arith.constant 64 : index
    %c0_53 = arith.constant 0 : index
    %80 = vector.load %arg8[%c64_52, %c0_53] : memref<144x256xf32, #tpu.memory_space<vmem>>, vector<16x256xf32>
    tpu.vector_store %arg8[%c64_52, %c0_53], %79 {strides = array<i32>} : memref<144x256xf32, #tpu.memory_space<vmem>>, vector<16x256xf32>,
    %c255_i32_54 = arith.constant 255 : i32
    %81 = tpu.dynamic_rotate %56 by %c255_i32_54 dim 1 : vector<16x256xf32>, i32 -> vector<16x256xf32>
    %c5_55 = arith.constant 5 : index
    %c0_56 = arith.constant 0 : index
    %82 = vector.load %arg1[%c5_55, %c0_56] : memref<9x256xf32, #tpu.memory_space<vmem>>, vector<1x256xf32>
    %83 = vector.broadcast %82 : vector<1x256xf32> to vector<16x256xf32>
    %84 = arith.mulf %81, %83 : vector<16x256xf32>
    %c80_57 = arith.constant 80 : index
    %c0_58 = arith.constant 0 : index
    %85 = vector.load %arg8[%c80_57, %c0_58] : memref<144x256xf32, #tpu.memory_space<vmem>>, vector<16x256xf32>
    tpu.vector_store %arg8[%c80_57, %c0_58], %84 {strides = array<i32>} : memref<144x256xf32, #tpu.memory_space<vmem>>, vector<16x256xf32>,
    %c241_i32_59 = arith.constant 241 : i32
    %86 = tpu.dynamic_rotate %56 by %c241_i32_59 dim 1 : vector<16x256xf32>, i32 -> vector<16x256xf32>
    %c6_60 = arith.constant 6 : index
    %c0_61 = arith.constant 0 : index
    %87 = vector.load %arg1[%c6_60, %c0_61] : memref<9x256xf32, #tpu.memory_space<vmem>>, vector<1x256xf32>
    %88 = vector.broadcast %87 : vector<1x256xf32> to vector<16x256xf32>
    %89 = arith.mulf %86, %88 : vector<16x256xf32>
    %c96_62 = arith.constant 96 : index
    %c0_63 = arith.constant 0 : index
    %90 = vector.load %arg8[%c96_62, %c0_63] : memref<144x256xf32, #tpu.memory_space<vmem>>, vector<16x256xf32>
    tpu.vector_store %arg8[%c96_62, %c0_63], %89 {strides = array<i32>} : memref<144x256xf32, #tpu.memory_space<vmem>>, vector<16x256xf32>,
    %c240_i32_64 = arith.constant 240 : i32
    %91 = tpu.dynamic_rotate %56 by %c240_i32_64 dim 1 : vector<16x256xf32>, i32 -> vector<16x256xf32>
    %c7_65 = arith.constant 7 : index
    %c0_66 = arith.constant 0 : index
    %92 = vector.load %arg1[%c7_65, %c0_66] : memref<9x256xf32, #tpu.memory_space<vmem>>, vector<1x256xf32>
    %93 = vector.broadcast %92 : vector<1x256xf32> to vector<16x256xf32>
    %94 = arith.mulf %91, %93 : vector<16x256xf32>
    %c112_67 = arith.constant 112 : index
    %c0_68 = arith.constant 0 : index
    %95 = vector.load %arg8[%c112_67, %c0_68] : memref<144x256xf32, #tpu.memory_space<vmem>>, vector<16x256xf32>
    tpu.vector_store %arg8[%c112_67, %c0_68], %94 {strides = array<i32>} : memref<144x256xf32, #tpu.memory_space<vmem>>, vector<16x256xf32>,
    %c239_i32_69 = arith.constant 239 : i32
    %96 = tpu.dynamic_rotate %56 by %c239_i32_69 dim 1 : vector<16x256xf32>, i32 -> vector<16x256xf32>
    %c8_70 = arith.constant 8 : index
    %c0_71 = arith.constant 0 : index
    %97 = vector.load %arg1[%c8_70, %c0_71] : memref<9x256xf32, #tpu.memory_space<vmem>>, vector<1x256xf32>
    %98 = vector.broadcast %97 : vector<1x256xf32> to vector<16x256xf32>
    %99 = arith.mulf %96, %98 : vector<16x256xf32>
    %c128_72 = arith.constant 128 : index
    %c0_73 = arith.constant 0 : index
    %100 = vector.load %arg8[%c128_72, %c0_73] : memref<144x256xf32, #tpu.memory_space<vmem>>, vector<16x256xf32>
    tpu.vector_store %arg8[%c128_72, %c0_73], %99 {strides = array<i32>} : memref<144x256xf32, #tpu.memory_space<vmem>>, vector<16x256xf32>,
    %c0_74 = arith.constant 0 : index
    %c0_75 = arith.constant 0 : index
    %101 = vector.load %arg5[%c0_74, %c0_75] : memref<16x144xf32, #tpu.memory_space<vmem>>, vector<16x144xf32>
    %c0_76 = arith.constant 0 : index
    %c0_77 = arith.constant 0 : index
    %102 = vector.load %arg8[%c0_76, %c0_77] : memref<144x256xf32, #tpu.memory_space<vmem>>, vector<144x256xf32>
    %cst_78 = arith.constant dense<0.000000e+00> : vector<16x256xf32>
    %103 = tpu.matmul %101, %102, %cst_78 {dimension_numbers = #tpu.dot_dimension_numbers<[1], [0], [0], [1], [0, 0, 1, 1], [], []>} : vector<16x144xf32>, vector<144x256xf32>, vector<16x256xf32> -> vector<16x256xf32>
    %c0_79 = arith.constant 0 : index
    %c0_80 = arith.constant 0 : index
    %104 = vector.load %arg6[%c0_79, %c0_80] : memref<16x1xf32, #tpu.memory_space<vmem>>, vector<16x1xf32>
    %105 = vector.broadcast %104 : vector<16x1xf32> to vector<16x256xf32>
    %106 = arith.addf %103, %105 : vector<16x256xf32>
    %107 = arith.addf %106, %1 : vector<16x256xf32>
    %cst_81 = arith.constant 0.000000e+00 : f32
    %108 = vector.broadcast %cst_81 : f32 to vector<16x256xf32>
    %109 = arith.cmpf oge, %107, %108 : vector<16x256xf32>
    %cst_82 = arith.constant 3.000000e-01 : f32
    %110 = vector.broadcast %cst_82 : f32 to vector<16x256xf32>
    %111 = arith.mulf %110, %107 : vector<16x256xf32>
    %112 = arith.select %109, %107, %111 : vector<16x256xi1>, vector<16x256xf32>
    %c0_83 = arith.constant 0 : index
    %c0_84 = arith.constant 0 : index
    %c0_85 = arith.constant 0 : index
    %113 = vector.load %arg7[%c0_83, %c0_84, %c0_85] : memref<1x16x256xf32, #tpu.memory_space<vmem>>, vector<1x16x256xf32>
    %114 = vector.shape_cast %113 : vector<1x16x256xf32> to vector<16x256xf32>
    %115 = vector.shape_cast %112 : vector<16x256xf32> to vector<1x16x256xf32>
    tpu.vector_store %arg7[%c0_83, %c0_84, %c0_85], %115 {strides = array<i32>} : memref<1x16x256xf32, #tpu.memory_space<vmem>>, vector<1x16x256xf32>,
    return
  }
  func.func @transform_0(%arg0: i32) -> (i32, i32) {
    %c0_i32 = arith.constant 0 : i32
    %c0_i32_0 = arith.constant 0 : i32
    %c0_i32_1 = arith.constant 0 : i32
    return %c0_i32, %c0_i32_0 : i32, i32
  }
  func.func @transform_1(%arg0: i32) -> (i32, i32, i32) {
    %c0_i32 = arith.constant 0 : i32
    %c0_i32_0 = arith.constant 0 : i32
    %c0_i32_1 = arith.constant 0 : i32
    return %arg0, %c0_i32, %c0_i32_0 : i32, i32, i32
  }
  func.func @transform_2(%arg0: i32) -> (i32, i32) {
    %c0_i32 = arith.constant 0 : i32
    %c0_i32_0 = arith.constant 0 : i32
    %c0_i32_1 = arith.constant 0 : i32
    return %c0_i32, %c0_i32_0 : i32, i32
  }
  func.func @transform_3(%arg0: i32) -> (i32, i32) {
    %c0_i32 = arith.constant 0 : i32
    %c0_i32_0 = arith.constant 0 : i32
    %c0_i32_1 = arith.constant 0 : i32
    return %c0_i32, %c0_i32_0 : i32, i32
  }
  func.func @transform_4(%arg0: i32) -> (i32, i32) {
    %c0_i32 = arith.constant 0 : i32
    %c0_i32_0 = arith.constant 0 : i32
    %c0_i32_1 = arith.constant 0 : i32
    return %c0_i32, %c0_i32_0 : i32, i32
  }
  func.func @transform_5(%arg0: i32) -> (i32, i32) {
    %c0_i32 = arith.constant 0 : i32
    %c0_i32_0 = arith.constant 0 : i32
    %c0_i32_1 = arith.constant 0 : i32
    return %c0_i32, %c0_i32_0 : i32, i32
  }
  func.func @transform_6(%arg0: i32) -> (i32, i32, i32) {
    %c0_i32 = arith.constant 0 : i32
    %c0_i32_0 = arith.constant 0 : i32
    %c0_i32_1 = arith.constant 0 : i32
    return %arg0, %c0_i32, %c0_i32_0 : i32, i32, i32
  }
}

</mosaic_0001>

<llo_original>
// kernel: residual_block_forward.1
$region0: #{residual_block_forward.1}
  #allocation0 [shape = 'u32[]', space=smem, size = 0x4, offset = 0x4, fixed_abs, tag = 'smem constant byte address 0x4 - core index']
  #allocation1 [shape = 'u32[144,128]{1,0:T(1,128)}', space=vmem, size = 0x12000, scoped, tag = 'internal scratch']
  #allocation2 [shape = 'f32[144,256]{1,0:T(8,128)}', space=vmem, size = 0x24000, scoped, tag = 'scratch operand']
  %s0 = inlined_call_operand.vmem [shape: f32[9,256], index: 0, kind: input, shape index: {}]
  %s1 = inlined_call_operand.vmem [shape: f32[2,16,256], index: 1, kind: input, shape index: {}]
  %s2 = inlined_call_operand.vmem [shape: f32[16,144], index: 2, kind: input, shape index: {}]
  %s3 = inlined_call_operand.vmem [shape: f32[16,1], index: 3, kind: input, shape index: {}]
  %s4 = inlined_call_operand.vmem [shape: f32[16,144], index: 4, kind: input, shape index: {}]
  %s5 = inlined_call_operand.vmem [shape: f32[16,1], index: 5, kind: input, shape index: {}]
  %s6 = inlined_call_operand.vmem [shape: f32[2,16,256], index: 6, kind: output, shape index: {}]
  %s7 = sld [smem:[#allocation0]]
  $region57: #{residual_block_forward.1} parent=0
    _
  %s9 = ssub.s32 1, %s7
  %s10 = scalar_select 0, %s9, %s7
  loop: start=0, step=1, limit=4
  $region2: #{residual_block_forward.1} parent=0 // loop_pre_header
    _
  $region3: #{residual_block_forward.1} parent=0 // loop_header
    %s12 = sphi 0, %s16
    %p13 = scmp.ge.s32.totalorder %s12, 4
    %s20 = sphi 0, %s20
    %s22 = sphi 0, %s20
    %s23 = sphi 0, %s22
    %s37 = sphi 0, %s23
    %s43 = sphi 0, %s45
    %s46 = sphi 0, %s43
    %s47 = sphi 0, %s46
    %s63 = sphi 0, %s47
    %s67 = sphi 0, %s67
    %s69 = sphi 0, %s67
    %s70 = sphi 0, %s69
    %s84 = sphi 0, %s70
    %s88 = sphi 0, %s88
    %s90 = sphi 0, %s88
    %s91 = sphi 0, %s90
    %s105 = sphi 0, %s91
    %s109 = sphi 0, %s109
    %s111 = sphi 0, %s109
    %s112 = sphi 0, %s111
    %s126 = sphi 0, %s112
    %s130 = sphi 0, %s130
    %s132 = sphi 0, %s130
    %s133 = sphi 0, %s132
    %s147 = sphi 0, %s133
    %s153 = sphi 0, %s155
    %s156 = sphi 0, %s153
    %s157 = sphi 0, %s156
    %s173 = sphi 0, %s157
  $region4: #{residual_block_forward.1} parent=0 // loop_header_branch
    %15 = sbr.rel (%p13) target = $region8
  $region5: #{residual_block_forward.1} parent=0 // loop_body
    %s17 = ssub.s32 %s12, 1
    %s18 = ssub.s32 %s12, 2
    %s19 = sadd.s32 %s12, 1
    %s21 = sadd.s32 %s20, 1
    %p24 = scmp.eq.s32.totalorder %s12, 1
    %p25 = scmp.ne.s32.totalorder %s20, %s22
    %p26 = scmp.eq.s32.totalorder %s12, 0
    %p27 = por %p25, %p26
    %p28 = scmp.ne.s32.totalorder %s20, %s22
    %p29 = scmp.eq.s32.totalorder %s17, 1
    %p30 = por %p28, %p29
    %p31 = scmp.ne.s32.totalorder %s22, %s23
    %p32 = scmp.eq.s32.totalorder %s17, 0
    %p33 = por %p31, %p32
    %p34 = scmp.ne.s32.totalorder %s22, %s23
    %p35 = scmp.eq.s32.totalorder %s18, 1
    %p36 = por %p34, %p35
    %p38 = scmp.ne.s32.totalorder %s23, %s37
    %p39 = scmp.eq.s32.totalorder %s18, 0
    %p40 = por %p38, %p39
    %s41 = ssub.s32 %s12, %s19
    %p42 = scmp.eq.s32.totalorder %s41, 0
    %s44 = sadd.s32 %s43, 1
    %s45 = scalar_select %p42, %s43, %s44
    %p48 = pneg %p42
    %p49 = scmp.eq.s32.totalorder %s12, 1
    %p50 = por %p48, %p49
    %p51 = scmp.ne.s32.totalorder %s43, %s46
    %p52 = scmp.eq.s32.totalorder %s12, 0
    %p53 = por %p51, %p52
    %p54 = scmp.ne.s32.totalorder %s43, %s46
    %p55 = scmp.eq.s32.totalorder %s17, 1
    %p56 = por %p54, %p55
    %p57 = scmp.ne.s32.totalorder %s46, %s47
    %p58 = scmp.eq.s32.totalorder %s17, 0
    %p59 = por %p57, %p58
    %p60 = scmp.ne.s32.totalorder %s46, %s47
    %p61 = scmp.eq.s32.totalorder %s18, 1
    %p62 = por %p60, %p61
    %p64 = scmp.ne.s32.totalorder %s47, %s63
    %p65 = scmp.eq.s32.totalorder %s18, 0
    %p66 = por %p64, %p65
    %s68 = sadd.s32 %s67, 1
    %p71 = scmp.eq.s32.totalorder %s12, 1
    %p72 = scmp.ne.s32.totalorder %s67, %s69
    %p73 = scmp.eq.s32.totalorder %s12, 0
    %p74 = por %p72, %p73
    %p75 = scmp.ne.s32.totalorder %s67, %s69
    %p76 = scmp.eq.s32.totalorder %s17, 1
    %p77 = por %p75, %p76
    %p78 = scmp.ne.s32.totalorder %s69, %s70
    %p79 = scmp.eq.s32.totalorder %s17, 0
    %p80 = por %p78, %p79
    %p81 = scmp.ne.s32.totalorder %s69, %s70
    %p82 = scmp.eq.s32.totalorder %s18, 1
    %p83 = por %p81, %p82
    %p85 = scmp.ne.s32.totalorder %s70, %s84
    %p86 = scmp.eq.s32.totalorder %s18, 0
    %p87 = por %p85, %p86
    %s89 = sadd.s32 %s88, 1
    %p92 = scmp.eq.s32.totalorder %s12, 1
    %p93 = scmp.ne.s32.totalorder %s88, %s90
    %p94 = scmp.eq.s32.totalorder %s12, 0
    %p95 = por %p93, %p94
    %p96 = scmp.ne.s32.totalorder %s88, %s90
    %p97 = scmp.eq.s32.totalorder %s17, 1
    %p98 = por %p96, %p97
    %p99 = scmp.ne.s32.totalorder %s90, %s91
    %p100 = scmp.eq.s32.totalorder %s17, 0
    %p101 = por %p99, %p100
    %p102 = scmp.ne.s32.totalorder %s90, %s91
    %p103 = scmp.eq.s32.totalorder %s18, 1
    %p104 = por %p102, %p103
    %p106 = scmp.ne.s32.totalorder %s91, %s105
    %p107 = scmp.eq.s32.totalorder %s18, 0
    %p108 = por %p106, %p107
    %s110 = sadd.s32 %s109, 1
    %p113 = scmp.eq.s32.totalorder %s12, 1
    %p114 = scmp.ne.s32.totalorder %s109, %s111
    %p115 = scmp.eq.s32.totalorder %s12, 0
    %p116 = por %p114, %p115
    %p117 = scmp.ne.s32.totalorder %s109, %s111
    %p118 = scmp.eq.s32.totalorder %s17, 1
    %p119 = por %p117, %p118
    %p120 = scmp.ne.s32.totalorder %s111, %s112
    %p121 = scmp.eq.s32.totalorder %s17, 0
    %p122 = por %p120, %p121
    %p123 = scmp.ne.s32.totalorder %s111, %s112
    %p124 = scmp.eq.s32.totalorder %s18, 1
    %p125 = por %p123, %p124
    %p127 = scmp.ne.s32.totalorder %s112, %s126
    %p128 = scmp.eq.s32.totalorder %s18, 0
    %p129 = por %p127, %p128
    %s131 = sadd.s32 %s130, 1
    %p134 = scmp.eq.s32.totalorder %s12, 1
    %p135 = scmp.ne.s32.totalorder %s130, %s132
    %p136 = scmp.eq.s32.totalorder %s12, 0
    %p137 = por %p135, %p136
    %p138 = scmp.ne.s32.totalorder %s130, %s132
    %p139 = scmp.eq.s32.totalorder %s17, 1
    %p140 = por %p138, %p139
    %p141 = scmp.ne.s32.totalorder %s132, %s133
    %p142 = scmp.eq.s32.totalorder %s17, 0
    %p143 = por %p141, %p142
    %p144 = scmp.ne.s32.totalorder %s132, %s133
    %p145 = scmp.eq.s32.totalorder %s18, 1
    %p146 = por %p144, %p145
    %p148 = scmp.ne.s32.totalorder %s133, %s147
    %p149 = scmp.eq.s32.totalorder %s18, 0
    %p150 = por %p148, %p149
    %s151 = ssub.s32 %s12, %s19
    %p152 = scmp.eq.s32.totalorder %s151, 0
    %s154 = sadd.s32 %s153, 1
    %s155 = scalar_select %p152, %s153, %s154
    %p158 = pneg %p152
    %p159 = scmp.eq.s32.totalorder %s12, 1
    %p160 = por %p158, %p159
    %p161 = scmp.ne.s32.totalorder %s153, %s156
    %p162 = scmp.eq.s32.totalorder %s12, 0
    %p163 = por %p161, %p162
    %p164 = scmp.ne.s32.totalorder %s153, %s156
    %p165 = scmp.eq.s32.totalorder %s17, 1
    %p166 = por %p164, %p165
    %p167 = scmp.ne.s32.totalorder %s156, %s157
    %p168 = scmp.eq.s32.totalorder %s17, 0
    %p169 = por %p167, %p168
    %p170 = scmp.ne.s32.totalorder %s156, %s157
    %p171 = scmp.eq.s32.totalorder %s18, 1
    %p172 = por %p170, %p171
    %p174 = scmp.ne.s32.totalorder %s157, %s173
    %p175 = scmp.eq.s32.totalorder %s18, 0
    %p176 = por %p174, %p175
    %p177 = scmp.le.s32.totalorder 1, %s12
    %p178 = scmp.lt.s32.totalorder %s12, 3
    %p179 = pnand %p177, %p178
    %p180 = pneg %p179
    // Predicated region
    $region9: #{residual_block_forward.1} parent=5 // pred_check
      _
    $region10: #{residual_block_forward.1} parent=5 // pred_check_branch
      %182 = sbr.rel (%p179) target = $region12
    $region11: #{residual_block_forward.1} parent=5 // pred_region
      %s183 = ssub.s32 %s12, 1
      // Predicated region
      $region13: #{residual_block_forward.1} parent=11 // pred_check
        %p184 = pneg %p33
      $region14: #{residual_block_forward.1} parent=11 // pred_check_branch
        %186 = sbr.rel (%p184) target = $region16
      $region15: #{residual_block_forward.1} parent=11 // pred_region
        _
      $region16: #{residual_block_forward.1} parent=11 // pred_fallthru
        _
      // Predicated region
      $region17: #{residual_block_forward.1} parent=11 // pred_check
        %p187 = pneg %p80
      $region18: #{residual_block_forward.1} parent=11 // pred_check_branch
        %189 = sbr.rel (%p187) target = $region20
      $region19: #{residual_block_forward.1} parent=11 // pred_region
        _
      $region20: #{residual_block_forward.1} parent=11 // pred_fallthru
        _
      // Predicated region
      $region21: #{residual_block_forward.1} parent=11 // pred_check
        %p190 = pneg %p101
      $region22: #{residual_block_forward.1} parent=11 // pred_check_branch
        %192 = sbr.rel (%p190) target = $region24
      $region23: #{residual_block_forward.1} parent=11 // pred_region
        _
      $region24: #{residual_block_forward.1} parent=11 // pred_fallthru
        _
      // Predicated region
      $region25: #{residual_block_forward.1} parent=11 // pred_check
        %p193 = pneg %p122
      $region26: #{residual_block_forward.1} parent=11 // pred_check_branch
        %195 = sbr.rel (%p193) target = $region28
      $region27: #{residual_block_forward.1} parent=11 // pred_region
        _
      $region28: #{residual_block_forward.1} parent=11 // pred_fallthru
        _
      // Predicated region
      $region29: #{residual_block_forward.1} parent=11 // pred_check
        %p196 = pneg %p143
      $region30: #{residual_block_forward.1} parent=11 // pred_check_branch
        %198 = sbr.rel (%p196) target = $region32
      $region31: #{residual_block_forward.1} parent=11 // pred_region
        _
      $region32: #{residual_block_forward.1} parent=11 // pred_fallthru
        _
    $region12: #{residual_block_forward.1} parent=5 // pred_fallthru
      _
    %p199 = scmp.lt.s32.totalorder %s12, 2
    // Predicated region
    $region33: #{residual_block_forward.1} parent=5 // pred_check
      %p200 = pneg %p199
    $region34: #{residual_block_forward.1} parent=5 // pred_check_branch
      %202 = sbr.rel (%p200) target = $region36
    $region35: #{residual_block_forward.1} parent=5 // pred_region
      // Predicated region
      $region37: #{residual_block_forward.1} parent=35 // pred_check
        %p203 = pneg %p53
      $region38: #{residual_block_forward.1} parent=35 // pred_check_branch
        %205 = sbr.rel (%p203) target = $region40
      $region39: #{residual_block_forward.1} parent=35 // pred_region
        %p206 = scmp.lt.s32.totalorder %s12, 1
        %s207 = scalar_select %p206, %s12, 1
        %s208 = smul.addr %s207, 4
        %s209 = smul.addr %s208, 8
        %s210 = scalar_lea.vmem %s1, %s209
      $region40: #{residual_block_forward.1} parent=35 // pred_fallthru
        _
    $region36: #{residual_block_forward.1} parent=5 // pred_fallthru
      _
    %p211 = scmp.le.s32.totalorder 1, %s12
    %p212 = scmp.lt.s32.totalorder %s12, 3
    %p213 = pnand %p211, %p212
    %p214 = pneg %p213
    // Predicated region
    $region41: #{residual_block_forward.1} parent=5 // pred_check
      _
    $region42: #{residual_block_forward.1} parent=5 // pred_check_branch
      %216 = sbr.rel (%p213) target = $region44
    $region43: #{residual_block_forward.1} parent=5 // pred_region
      %s217 = ssub.s32 %s12, 1
      %p218 = pneg %p33
      %p219 = pneg %p30
      %p220 = scmp.lt.s32.totalorder %s17, 1
      %s221 = scalar_select %p220, %s17, 1
      %s222 = smul.addr %s221, 4
      %s223 = smul.addr %s222, 8
      %s224 = scalar_lea.vmem %s1, %s223
      %p225 = pneg %p59
      %p226 = pneg %p56
      %p227 = pneg %p80
      %p228 = pneg %p77
      %p229 = pneg %p101
      %p230 = pneg %p98
      %p231 = pneg %p122
      %p232 = pneg %p119
      %p233 = pneg %p143
      %p234 = pneg %p140
      %p235 = pneg %p169
      %p236 = pneg %p166
      %p237 = scmp.lt.s32.totalorder %s17, 1
      %s238 = scalar_select %p237, %s17, 1
      %s239 = smul.addr %s238, 4
      %s240 = smul.addr %s239, 8
      %s241 = scalar_lea.vmem %s6, %s240
      %p242 = scmp.lt.s32.totalorder %s17, 1
      %s243 = scalar_select %p242, %s17, 1
      %s244 = smul.addr %s243, 4
      %s245 = smul.addr %s244, 8
      %s246 = scalar_lea.vmem %s1, %s245
      %p247 = scmp.lt.s32.totalorder %s17, 1
      %s248 = scalar_select %p247, %s17, 1
      %s249 = smul.addr %s248, 4
      %s250 = smul.addr %s249, 8
      %s251 = scalar_lea.vmem %s6, %s250
      %v252 = vld [vmem:[%s246] sm:$0xff]
      %v253 = vld [vmem:[%s246 + $0x8] sm:$0xff]
      %v254 = vld [vmem:[%s246 + $0x10] sm:$0xff]
      %v255 = vld [vmem:[%s246 + $0x18] sm:$0xff]
      %256 = vrot.lane.b32.xlu0 %v252, 17
      %v257 = vpop.permute.xlu0 %256
      %258 = vrot.lane.b32.xlu0 %v254, 17
      %v259 = vpop.permute.xlu0 %258
      %260 = vrot.lane.b32.xlu0 %v253, 17
      %v261 = vpop.permute.xlu0 %260
      %262 = vrot.lane.b32.xlu0 %v255, 17
      %v263 = vpop.permute.xlu0 %262
      %v264 = vlaneseq
      %v265 = vand.u32 %v264, 127
      %vm266 = vcmp.lt.s32.totalorder %v265, 17
      %v267 = vsel %vm266, %v257, %v261
      %v268 = vsel %vm266, %v259, %v263
      %v269 = vsel %vm266, %v261, %v257
      %v270 = vsel %vm266, %v263, %v259
      %v271 = vld [vmem:[%s0] ss:$8 sm:$0x3]
      %v273 = vlaneseq
      %v274 = vshrl.u32 %v273, 7
      %v275 = vsub.s32 0, %v274
      %v276 = vrot.slane %v271, %v275
      %v277 = vlaneseq
      %v278 = vshrl.u32 %v277, 7
      %v279 = vsub.s32 1, %v278
      %v280 = vrot.slane %v271, %v279
      %v283 = vmul.f32 %v269, %v276
      %v284 = vmul.f32 %v267, %v280
      %v285 = vmul.f32 %v270, %v276
      %v286 = vmul.f32 %v268, %v280
      %287 = vst [vmem:[#allocation2] sm:$0xff] %v283
      %288 = vst [vmem:[#allocation2 + $0x8] sm:$0xff] %v284
      %289 = vst [vmem:[#allocation2 + $0x10] sm:$0xff] %v285
      %290 = vst [vmem:[#allocation2 + $0x18] sm:$0xff] %v286
      %291 = vrot.lane.b32.xlu0 %v252, 16
      %v292 = vpop.permute.xlu0 %291
      %293 = vrot.lane.b32.xlu0 %v254, 16
      %v294 = vpop.permute.xlu0 %293
      %295 = vrot.lane.b32.xlu0 %v253, 16
      %v296 = vpop.permute.xlu0 %295
      %297 = vrot.lane.b32.xlu0 %v255, 16
      %v298 = vpop.permute.xlu0 %297
      %vm299 = vcmp.lt.s32.totalorder %v265, 16
      %v300 = vsel %vm299, %v292, %v296
      %v301 = vsel %vm299, %v294, %v298
      %v302 = vsel %vm299, %v296, %v292
      %v303 = vsel %vm299, %v298, %v294
      %s304 = scalar_lea.vmem %s0, 1
      %v305 = vld [vmem:[%s304] ss:$8 sm:$0x3]
      %v307 = vlaneseq
      %v308 = vshrl.u32 %v307, 7
      %v309 = vsub.s32 0, %v308
      %v310 = vrot.slane %v305, %v309
      %v311 = vlaneseq
      %v312 = vshrl.u32 %v311, 7
      %v313 = vsub.s32 1, %v312
      %v314 = vrot.slane %v305, %v313
      %v317 = vmul.f32 %v302, %v310
      %v318 = vmul.f32 %v300, %v314
      %v319 = vmul.f32 %v303, %v310
      %v320 = vmul.f32 %v301, %v314
      %321 = vst [vmem:[#allocation2 + $0x20] sm:$0xff] %v317
      %322 = vst [vmem:[#allocation2 + $0x28] sm:$0xff] %v318
      %323 = vst [vmem:[#allocation2 + $0x30] sm:$0xff] %v319
      %324 = vst [vmem:[#allocation2 + $0x38] sm:$0xff] %v320
      %325 = vrot.lane.b32.xlu0 %v252, 15
      %v326 = vpop.permute.xlu0 %325
      %327 = vrot.lane.b32.xlu0 %v254, 15
      %v328 = vpop.permute.xlu0 %327
      %329 = vrot.lane.b32.xlu0 %v253, 15
      %v330 = vpop.permute.xlu0 %329
      %331 = vrot.lane.b32.xlu0 %v255, 15
      %v332 = vpop.permute.xlu0 %331
      %vm333 = vcmp.lt.s32.totalorder %v265, 15
      %v334 = vsel %vm333, %v326, %v330
      %v335 = vsel %vm333, %v328, %v332
      %v336 = vsel %vm333, %v330, %v326
      %v337 = vsel %vm333, %v332, %v328
      %s338 = scalar_lea.vmem %s0, 2
      %v339 = vld [vmem:[%s338] ss:$8 sm:$0x3]
      %v341 = vlaneseq
      %v342 = vshrl.u32 %v341, 7
      %v343 = vsub.s32 0, %v342
      %v344 = vrot.slane %v339, %v343
      %v345 = vlaneseq
      %v346 = vshrl.u32 %v345, 7
      %v347 = vsub.s32 1, %v346
      %v348 = vrot.slane %v339, %v347
      %v351 = vmul.f32 %v336, %v344
      %v352 = vmul.f32 %v334, %v348
      %v353 = vmul.f32 %v337, %v344
      %v354 = vmul.f32 %v335, %v348
      %355 = vst [vmem:[#allocation2 + $0x40] sm:$0xff] %v351
      %356 = vst [vmem:[#allocation2 + $0x48] sm:$0xff] %v352
      %357 = vst [vmem:[#allocation2 + $0x50] sm:$0xff] %v353
      %358 = vst [vmem:[#allocation2 + $0x58] sm:$0xff] %v354
      %359 = vrot.lane.b32.xlu0 %v252, 1
      %v360 = vpop.permute.xlu0 %359
      %361 = vrot.lane.b32.xlu0 %v254, 1
      %v362 = vpop.permute.xlu0 %361
      %363 = vrot.lane.b32.xlu0 %v253, 1
      %v364 = vpop.permute.xlu0 %363
      %365 = vrot.lane.b32.xlu0 %v255, 1
      %v366 = vpop.permute.xlu0 %365
      %vm367 = vcmp.lt.s32.totalorder %v265, 1
      %v368 = vsel %vm367, %v360, %v364
      %v369 = vsel %vm367, %v362, %v366
      %v370 = vsel %vm367, %v364, %v360
      %v371 = vsel %vm367, %v366, %v362
      %s372 = scalar_lea.vmem %s0, 3
      %v373 = vld [vmem:[%s372] ss:$8 sm:$0x3]
      %v375 = vlaneseq
      %v376 = vshrl.u32 %v375, 7
      %v377 = vsub.s32 0, %v376
      %v378 = vrot.slane %v373, %v377
      %v379 = vlaneseq
      %v380 = vshrl.u32 %v379, 7
      %v381 = vsub.s32 1, %v380
      %v382 = vrot.slane %v373, %v381
      %v385 = vmul.f32 %v370, %v378
      %v386 = vmul.f32 %v368, %v382
      %v387 = vmul.f32 %v371, %v378
      %v388 = vmul.f32 %v369, %v382
      %389 = vst [vmem:[#allocation2 + $0x60] sm:$0xff] %v385
      %390 = vst [vmem:[#allocation2 + $0x68] sm:$0xff] %v386
      %391 = vst [vmem:[#allocation2 + $0x70] sm:$0xff] %v387
      %392 = vst [vmem:[#allocation2 + $0x78] sm:$0xff] %v388
      %s393 = scalar_lea.vmem %s0, 4
      %v394 = vld [vmem:[%s393] ss:$8 sm:$0x3]
      %v396 = vlaneseq
      %v397 = vshrl.u32 %v396, 7
      %v398 = vsub.s32 0, %v397
      %v399 = vrot.slane %v394, %v398
      %v400 = vlaneseq
      %v401 = vshrl.u32 %v400, 7
      %v402 = vsub.s32 1, %v401
      %v403 = vrot.slane %v394, %v402
      %v406 = vmul.f32 %v252, %v399
      %v407 = vmul.f32 %v253, %v403
      %v408 = vmul.f32 %v254, %v399
      %v409 = vmul.f32 %v255, %v403
      %410 = vst [vmem:[#allocation2 + $0x80] sm:$0xff] %v406
      %411 = vst [vmem:[#allocation2 + $0x88] sm:$0xff] %v407
      %412 = vst [vmem:[#allocation2 + $0x90] sm:$0xff] %v408
      %413 = vst [vmem:[#allocation2 + $0x98] sm:$0xff] %v409
      %414 = vrot.lane.b32.xlu0 %v252, 127
      %v415 = vpop.permute.xlu0 %414
      %416 = vrot.lane.b32.xlu0 %v254, 127
      %v417 = vpop.permute.xlu0 %416
      %418 = vrot.lane.b32.xlu0 %v253, 127
      %v419 = vpop.permute.xlu0 %418
      %420 = vrot.lane.b32.xlu0 %v255, 127
      %v421 = vpop.permute.xlu0 %420
      %vm422 = vcmp.lt.s32.totalorder %v265, 127
      %v423 = vsel %vm422, %v415, %v419
      %v424 = vsel %vm422, %v417, %v421
      %v425 = vsel %vm422, %v419, %v415
      %v426 = vsel %vm422, %v421, %v417
      %s427 = scalar_lea.vmem %s0, 5
      %v428 = vld [vmem:[%s427] ss:$8 sm:$0x3]
      %v430 = vlaneseq
      %v431 = vshrl.u32 %v430, 7
      %v432 = vsub.s32 0, %v431
      %v433 = vrot.slane %v428, %v432
      %v434 = vlaneseq
      %v435 = vshrl.u32 %v434, 7
      %v436 = vsub.s32 1, %v435
      %v437 = vrot.slane %v428, %v436
      %v440 = vmul.f32 %v423, %v433
      %v441 = vmul.f32 %v425, %v437
      %v442 = vmul.f32 %v424, %v433
      %v443 = vmul.f32 %v426, %v437
      %444 = vst [vmem:[#allocation2 + $0xa0] sm:$0xff] %v440
      %445 = vst [vmem:[#allocation2 + $0xa8] sm:$0xff] %v441
      %446 = vst [vmem:[#allocation2 + $0xb0] sm:$0xff] %v442
      %447 = vst [vmem:[#allocation2 + $0xb8] sm:$0xff] %v443
      %448 = vrot.lane.b32.xlu0 %v252, 113
      %v449 = vpop.permute.xlu0 %448
      %450 = vrot.lane.b32.xlu0 %v254, 113
      %v451 = vpop.permute.xlu0 %450
      %452 = vrot.lane.b32.xlu0 %v253, 113
      %v453 = vpop.permute.xlu0 %452
      %454 = vrot.lane.b32.xlu0 %v255, 113
      %v455 = vpop.permute.xlu0 %454
      %vm456 = vcmp.lt.s32.totalorder %v265, 113
      %v457 = vsel %vm456, %v449, %v453
      %v458 = vsel %vm456, %v451, %v455
      %v459 = vsel %vm456, %v453, %v449
      %v460 = vsel %vm456, %v455, %v451
      %s461 = scalar_lea.vmem %s0, 6
      %v462 = vld [vmem:[%s461] ss:$8 sm:$0x3]
      %v464 = vlaneseq
      %v465 = vshrl.u32 %v464, 7
      %v466 = vsub.s32 0, %v465
      %v467 = vrot.slane %v462, %v466
      %v468 = vlaneseq
      %v469 = vshrl.u32 %v468, 7
      %v470 = vsub.s32 1, %v469
      %v471 = vrot.slane %v462, %v470
      %v474 = vmul.f32 %v457, %v467
      %v475 = vmul.f32 %v459, %v471
      %v476 = vmul.f32 %v458, %v467
      %v477 = vmul.f32 %v460, %v471
      %478 = vst [vmem:[#allocation2 + $0xc0] sm:$0xff] %v474
      %479 = vst [vmem:[#allocation2 + $0xc8] sm:$0xff] %v475
      %480 = vst [vmem:[#allocation2 + $0xd0] sm:$0xff] %v476
      %481 = vst [vmem:[#allocation2 + $0xd8] sm:$0xff] %v477
      %482 = vrot.lane.b32.xlu0 %v252, 112
      %v483 = vpop.permute.xlu0 %482
      %484 = vrot.lane.b32.xlu0 %v254, 112
      %v485 = vpop.permute.xlu0 %484
      %486 = vrot.lane.b32.xlu0 %v253, 112
      %v487 = vpop.permute.xlu0 %486
      %488 = vrot.lane.b32.xlu0 %v255, 112
      %v489 = vpop.permute.xlu0 %488
      %vm490 = vcmp.lt.s32.totalorder %v265, 112
      %v491 = vsel %vm490, %v483, %v487
      %v492 = vsel %vm490, %v485, %v489
      %v493 = vsel %vm490, %v487, %v483
      %v494 = vsel %vm490, %v489, %v485
      %s495 = scalar_lea.vmem %s0, 7
      %v496 = vld [vmem:[%s495] ss:$8 sm:$0x3]
      %v498 = vlaneseq
      %v499 = vshrl.u32 %v498, 7
      %v500 = vsub.s32 0, %v499
      %v501 = vrot.slane %v496, %v500
      %v502 = vlaneseq
      %v503 = vshrl.u32 %v502, 7
      %v504 = vsub.s32 1, %v503
      %v505 = vrot.slane %v496, %v504
      %v508 = vmul.f32 %v491, %v501
      %v509 = vmul.f32 %v493, %v505
      %v510 = vmul.f32 %v492, %v501
      %v511 = vmul.f32 %v494, %v505
      %512 = vst [vmem:[#allocation2 + $0xe0] sm:$0xff] %v508
      %513 = vst [vmem:[#allocation2 + $0xe8] sm:$0xff] %v509
      %514 = vst [vmem:[#allocation2 + $0xf0] sm:$0xff] %v510
      %515 = vst [vmem:[#allocation2 + $0xf8] sm:$0xff] %v511
      %516 = vrot.lane.b32.xlu0 %v252, 111
      %v517 = vpop.permute.xlu0 %516
      %518 = vrot.lane.b32.xlu0 %v254, 111
      %v519 = vpop.permute.xlu0 %518
      %520 = vrot.lane.b32.xlu0 %v253, 111
      %v521 = vpop.permute.xlu0 %520
      %522 = vrot.lane.b32.xlu0 %v255, 111
      %v523 = vpop.permute.xlu0 %522
      %vm524 = vcmp.lt.s32.totalorder %v265, 111
      %v525 = vsel %vm524, %v517, %v521
      %v526 = vsel %vm524, %v519, %v523
      %v527 = vsel %vm524, %v521, %v517
      %v528 = vsel %vm524, %v523, %v519
      %s529 = scalar_lea.vmem %s0, 16
      %v530 = vld [vmem:[%s529] ss:$8 sm:$0x3]
      %v532 = vlaneseq
      %v533 = vshrl.u32 %v532, 7
      %v534 = vsub.s32 0, %v533
      %v535 = vrot.slane %v530, %v534
      %v536 = vlaneseq
      %v537 = vshrl.u32 %v536, 7
      %v538 = vsub.s32 1, %v537
      %v539 = vrot.slane %v530, %v538
      %v542 = vmul.f32 %v525, %v535
      %v543 = vmul.f32 %v527, %v539
      %v544 = vmul.f32 %v526, %v535
      %v545 = vmul.f32 %v528, %v539
      %546 = vst [vmem:[#allocation2 + $0x100] sm:$0xff] %v542
      %547 = vst [vmem:[#allocation2 + $0x108] sm:$0xff] %v543
      %548 = vst [vmem:[#allocation2 + $0x110] sm:$0xff] %v544
      %549 = vst [vmem:[#allocation2 + $0x118] sm:$0xff] %v545
      %v550 = vld [vmem:[%s2] sm:$0xff]
      %v551 = vld [vmem:[%s2 + $0x8] sm:$0xff]
      %v552 = vld [vmem:[%s2 + $0x10] sm:$0xff]
      %v553 = vld [vmem:[%s2 + $0x18] sm:$0xff]
      %v554 = vld [vmem:[#allocation2] sm:$0xff]
      %v555 = vld [vmem:[#allocation2 + $0x8] sm:$0xff]
      %v556 = vld [vmem:[#allocation2 + $0x10] sm:$0xff]
      %v557 = vld [vmem:[#allocation2 + $0x18] sm:$0xff]
      %v558 = vld [vmem:[#allocation2 + $0x20] sm:$0xff]
      %v559 = vld [vmem:[#allocation2 + $0x28] sm:$0xff]
      %v560 = vld [vmem:[#allocation2 + $0x30] sm:$0xff]
      %v561 = vld [vmem:[#allocation2 + $0x38] sm:$0xff]
      %v562 = vld [vmem:[#allocation2 + $0x40] sm:$0xff]
      %v563 = vld [vmem:[#allocation2 + $0x48] sm:$0xff]
      %v564 = vld [vmem:[#allocation2 + $0x50] sm:$0xff]
      %v565 = vld [vmem:[#allocation2 + $0x58] sm:$0xff]
      %v566 = vld [vmem:[#allocation2 + $0x60] sm:$0xff]
      %v567 = vld [vmem:[#allocation2 + $0x68] sm:$0xff]
      %v568 = vld [vmem:[#allocation2 + $0x70] sm:$0xff]
      %v569 = vld [vmem:[#allocation2 + $0x78] sm:$0xff]
      %v570 = vld [vmem:[#allocation2 + $0x80] sm:$0xff]
      %v571 = vld [vmem:[#allocation2 + $0x88] sm:$0xff]
      %v572 = vld [vmem:[#allocation2 + $0x90] sm:$0xff]
      %v573 = vld [vmem:[#allocation2 + $0x98] sm:$0xff]
      %v574 = vld [vmem:[#allocation2 + $0xa0] sm:$0xff]
      %v575 = vld [vmem:[#allocation2 + $0xa8] sm:$0xff]
      %v576 = vld [vmem:[#allocation2 + $0xb0] sm:$0xff]
      %v577 = vld [vmem:[#allocation2 + $0xb8] sm:$0xff]
      %v578 = vld [vmem:[#allocation2 + $0xc0] sm:$0xff]
      %v579 = vld [vmem:[#allocation2 + $0xc8] sm:$0xff]
      %v580 = vld [vmem:[#allocation2 + $0xd0] sm:$0xff]
      %v581 = vld [vmem:[#allocation2 + $0xd8] sm:$0xff]
      %v582 = vld [vmem:[#allocation2 + $0xe0] sm:$0xff]
      %v583 = vld [vmem:[#allocation2 + $0xe8] sm:$0xff]
      %v584 = vld [vmem:[#allocation2 + $0xf0] sm:$0xff]
      %v585 = vld [vmem:[#allocation2 + $0xf8] sm:$0xff]
      %v586 = vld [vmem:[#allocation2 + $0x100] sm:$0xff]
      %v587 = vld [vmem:[#allocation2 + $0x108] sm:$0xff]
      %v588 = vld [vmem:[#allocation2 + $0x110] sm:$0xff]
      %v589 = vld [vmem:[#allocation2 + $0x118] sm:$0xff]
      %v590 = vld [vmem:[%s3] sm:$0xff]
      %v591 = vld [vmem:[%s3 + $0x8] sm:$0xff]
      %593 = vset.pattern.permute.xlu0 0
      %594 = vperm.xlu0 %593, %v590
      %v595 = vpop.permute.xlu0 %594
      %598 = vset.pattern.permute.xlu0 0
      %599 = vperm.xlu0 %598, %v591
      %v600 = vpop.permute.xlu0 %599
      %vm602 = vcmask 130048
      %v604 = vsel %vm602, %v551, 0
      %v607 = vsel %vm602, %v553, 0
      %609 = vmatprep.subr.mxu0 %v555
      %610 = vmatpush1.msra.mxu0 %v554
      %611 = vmatprep.subr.mxu0 %v557
      %612 = vmatpush1.msra.mxu0 %v556
      %613 = vmatprep.subr.mxu0 %v559
      %614 = vmatpush1.msra.mxu0 %v558
      %615 = vmatprep.subr.mxu0 %v561
      %616 = vmatpush1.msra.mxu0 %v560
      %617 = vmatprep.subr.mxu0 %v563
      %618 = vmatpush1.msra.mxu0 %v562
      %619 = vmatprep.subr.mxu0 %v565
      %620 = vmatpush1.msra.mxu0 %v564
      %621 = vmatprep.subr.mxu0 %v567
      %622 = vmatpush1.msra.mxu0 %v566
      %623 = vmatprep.subr.mxu0 %v569
      %624 = vmatpush1.msra.mxu0 %v568
      %625 = vmatprep.subr.mxu0 %v571
      %626 = vmatpush1.msra.mxu0 %v570
      %627 = vmatprep.subr.mxu0 %v573
      %628 = vmatpush1.msra.mxu0 %v572
      %629 = vmatprep.subr.mxu0 %v575
      %630 = vmatpush1.msra.mxu0 %v574
      %631 = vmatprep.subr.mxu0 %v577
      %632 = vmatpush1.msra.mxu0 %v576
      %633 = vmatprep.subr.mxu0 %v579
      %634 = vmatpush1.msra.mxu0 %v578
      %635 = vmatprep.subr.mxu0 %v581
      %636 = vmatpush1.msra.mxu0 %v580
      %637 = vmatprep.subr.mxu0 %v583
      %638 = vmatpush1.msra.mxu0 %v582
      %639 = vmatprep.subr.mxu0 %v585
      %640 = vmatpush1.msra.mxu0 %v584
      %641 = vmatprep.subr.mxu0 %v587
      %642 = vmatpush1.msra.mxu0 %v586
      %643 = vmatprep.subr.mxu0 %v589
      %644 = vmatpush1.msra.mxu0 %v588
      %645 = vmatprep.subr.mxu0 0.0
      %646 = vmatpush1.msra.mxu0 0.0
      %647 = vmatprep.subr.mxu0 0.0
      %648 = vmatpush1.msra.mxu0 0.0
      %649 = vmatprep.subr.mxu0 0.0
      %650 = vmatpush1.msra.mxu0 0.0
      %651 = vmatprep.subr.mxu0 0.0
      %652 = vmatpush1.msra.mxu0 0.0
      %653 = vmatprep.subr.mxu0 0.0
      %654 = vmatpush1.msra.mxu0 0.0
      %655 = vmatprep.subr.mxu0 0.0
      %656 = vmatpush1.msra.mxu0 0.0
      %657 = vmatprep.subr.mxu0 0.0
      %658 = vmatpush1.msra.mxu0 0.0
      %659 = vmatprep.subr.mxu0 0.0
      %660 = vmatpush1.msra.mxu0 0.0
      %661 = vmatprep.subr.mxu0 0.0
      %662 = vmatpush1.msra.mxu0 0.0
      %663 = vmatprep.subr.mxu0 0.0
      %664 = vmatpush1.msra.mxu0 0.0
      %665 = vmatprep.subr.mxu0 0.0
      %666 = vmatpush1.msra.mxu0 0.0
      %667 = vmatprep.subr.mxu0 0.0
      %668 = vmatpush1.msra.mxu0 0.0
      %669 = vmatprep.subr.mxu0 0.0
      %670 = vmatpush1.msra.mxu0 0.0
      %671 = vmatprep.subr.mxu0 0.0
      %672 = vmatpush1.msra.mxu0 0.0
      %673 = vmatprep.mubr.f32.mxu0 %v604
      %674 = vmatmul.mubr.f32.gmra.mrb[0].mxu0 %v550
      %v675 = vpop.f32.mrb[0].mxu0
      %v676 = vadd.f32 %v595, %v675
      %v677 = vpop.f32.mrb[0].mxu0
      %v678 = vadd.f32 %v595, %v677
      %679 = vmatprep.mubr.f32.mxu0 %v607
      %680 = vmatmul.mubr.f32.gmra.mrb[0].mxu0 %v552
      %v681 = vpop.f32.mrb[0].mxu0
      %v682 = vadd.f32 %v600, %v681
      %v683 = vpop.f32.mrb[0].mxu0
      %v684 = vadd.f32 %v600, %v683
      %685 = vdwg.mxu0
      %vm686 = vcmp.ge.f32.partialorder %v676, 0.0
      %vm687 = vcmp.ge.f32.partialorder %v678, 0.0
      %vm688 = vcmp.ge.f32.partialorder %v682, 0.0
      %vm689 = vcmp.ge.f32.partialorder %v684, 0.0
      %v690 = vmul.f32 %v676, 0.3
      %v691 = vmul.f32 %v678, 0.3
      %v692 = vmul.f32 %v682, 0.3
      %v693 = vmul.f32 %v684, 0.3
      %v694 = vsel %vm686, %v676, %v690
      %v695 = vsel %vm687, %v678, %v691
      %v696 = vsel %vm688, %v682, %v692
      %v697 = vsel %vm689, %v684, %v693
      %698 = vrot.lane.b32.xlu0 %v694, 17
      %v699 = vpop.permute.xlu0 %698
      %700 = vrot.lane.b32.xlu0 %v696, 17
      %v701 = vpop.permute.xlu0 %700
      %702 = vrot.lane.b32.xlu0 %v695, 17
      %v703 = vpop.permute.xlu0 %702
      %704 = vrot.lane.b32.xlu0 %v697, 17
      %v705 = vpop.permute.xlu0 %704
      %v706 = vsel %vm266, %v699, %v703
      %v707 = vsel %vm266, %v701, %v705
      %v708 = vsel %vm266, %v703, %v699
      %v709 = vsel %vm266, %v705, %v701
      %v710 = vld [vmem:[%s0] ss:$8 sm:$0x3]
      %v712 = vlaneseq
      %v713 = vshrl.u32 %v712, 7
      %v714 = vsub.s32 0, %v713
      %v715 = vrot.slane %v710, %v714
      %v716 = vlaneseq
      %v717 = vshrl.u32 %v716, 7
      %v718 = vsub.s32 1, %v717
      %v719 = vrot.slane %v710, %v718
      %v722 = vmul.f32 %v708, %v715
      %v723 = vmul.f32 %v706, %v719
      %v724 = vmul.f32 %v709, %v715
      %v725 = vmul.f32 %v707, %v719
      %726 = vst [vmem:[#allocation2] sm:$0xff] %v722
      %727 = vst [vmem:[#allocation2 + $0x8] sm:$0xff] %v723
      %728 = vst [vmem:[#allocation2 + $0x10] sm:$0xff] %v724
      %729 = vst [vmem:[#allocation2 + $0x18] sm:$0xff] %v725
      %730 = vrot.lane.b32.xlu0 %v694, 16
      %v731 = vpop.permute.xlu0 %730
      %732 = vrot.lane.b32.xlu0 %v696, 16
      %v733 = vpop.permute.xlu0 %732
      %734 = vrot.lane.b32.xlu0 %v695, 16
      %v735 = vpop.permute.xlu0 %734
      %736 = vrot.lane.b32.xlu0 %v697, 16
      %v737 = vpop.permute.xlu0 %736
      %v738 = vsel %vm299, %v731, %v735
      %v739 = vsel %vm299, %v733, %v737
      %v740 = vsel %vm299, %v735, %v731
      %v741 = vsel %vm299, %v737, %v733
      %v742 = vld [vmem:[%s304] ss:$8 sm:$0x3]
      %v744 = vlaneseq
      %v745 = vshrl.u32 %v744, 7
      %v746 = vsub.s32 0, %v745
      %v747 = vrot.slane %v742, %v746
      %v748 = vlaneseq
      %v749 = vshrl.u32 %v748, 7
      %v750 = vsub.s32 1, %v749
      %v751 = vrot.slane %v742, %v750
      %v754 = vmul.f32 %v740, %v747
      %v755 = vmul.f32 %v738, %v751
      %v756 = vmul.f32 %v741, %v747
      %v757 = vmul.f32 %v739, %v751
      %758 = vst [vmem:[#allocation2 + $0x20] sm:$0xff] %v754
      %759 = vst [vmem:[#allocation2 + $0x28] sm:$0xff] %v755
      %760 = vst [vmem:[#allocation2 + $0x30] sm:$0xff] %v756
      %761 = vst [vmem:[#allocation2 + $0x38] sm:$0xff] %v757
      %762 = vrot.lane.b32.xlu0 %v694, 15
      %v763 = vpop.permute.xlu0 %762
      %764 = vrot.lane.b32.xlu0 %v696, 15
      %v765 = vpop.permute.xlu0 %764
      %766 = vrot.lane.b32.xlu0 %v695, 15
      %v767 = vpop.permute.xlu0 %766
      %768 = vrot.lane.b32.xlu0 %v697, 15
      %v769 = vpop.permute.xlu0 %768
      %v770 = vsel %vm333, %v763, %v767
      %v771 = vsel %vm333, %v765, %v769
      %v772 = vsel %vm333, %v767, %v763
      %v773 = vsel %vm333, %v769, %v765
      %v774 = vld [vmem:[%s338] ss:$8 sm:$0x3]
      %v776 = vlaneseq
      %v777 = vshrl.u32 %v776, 7
      %v778 = vsub.s32 0, %v777
      %v779 = vrot.slane %v774, %v778
      %v780 = vlaneseq
      %v781 = vshrl.u32 %v780, 7
      %v782 = vsub.s32 1, %v781
      %v783 = vrot.slane %v774, %v782
      %v786 = vmul.f32 %v772, %v779
      %v787 = vmul.f32 %v770, %v783
      %v788 = vmul.f32 %v773, %v779
      %v789 = vmul.f32 %v771, %v783
      %790 = vst [vmem:[#allocation2 + $0x40] sm:$0xff] %v786
      %791 = vst [vmem:[#allocation2 + $0x48] sm:$0xff] %v787
      %792 = vst [vmem:[#allocation2 + $0x50] sm:$0xff] %v788
      %793 = vst [vmem:[#allocation2 + $0x58] sm:$0xff] %v789
      %794 = vrot.lane.b32.xlu0 %v694, 1
      %v795 = vpop.permute.xlu0 %794
      %796 = vrot.lane.b32.xlu0 %v696, 1
      %v797 = vpop.permute.xlu0 %796
      %798 = vrot.lane.b32.xlu0 %v695, 1
      %v799 = vpop.permute.xlu0 %798
      %800 = vrot.lane.b32.xlu0 %v697, 1
      %v801 = vpop.permute.xlu0 %800
      %v802 = vsel %vm367, %v795, %v799
      %v803 = vsel %vm367, %v797, %v801
      %v804 = vsel %vm367, %v799, %v795
      %v805 = vsel %vm367, %v801, %v797
      %v806 = vld [vmem:[%s372] ss:$8 sm:$0x3]
      %v808 = vlaneseq
      %v809 = vshrl.u32 %v808, 7
      %v810 = vsub.s32 0, %v809
      %v811 = vrot.slane %v806, %v810
      %v812 = vlaneseq
      %v813 = vshrl.u32 %v812, 7
      %v814 = vsub.s32 1, %v813
      %v815 = vrot.slane %v806, %v814
      %v818 = vmul.f32 %v804, %v811
      %v819 = vmul.f32 %v802, %v815
      %v820 = vmul.f32 %v805, %v811
      %v821 = vmul.f32 %v803, %v815
      %822 = vst [vmem:[#allocation2 + $0x60] sm:$0xff] %v818
      %823 = vst [vmem:[#allocation2 + $0x68] sm:$0xff] %v819
      %824 = vst [vmem:[#allocation2 + $0x70] sm:$0xff] %v820
      %825 = vst [vmem:[#allocation2 + $0x78] sm:$0xff] %v821
      %v826 = vld [vmem:[%s393] ss:$8 sm:$0x3]
      %v828 = vlaneseq
      %v829 = vshrl.u32 %v828, 7
      %v830 = vsub.s32 0, %v829
      %v831 = vrot.slane %v826, %v830
      %v832 = vlaneseq
      %v833 = vshrl.u32 %v832, 7
      %v834 = vsub.s32 1, %v833
      %v835 = vrot.slane %v826, %v834
      %v838 = vmul.f32 %v694, %v831
      %v839 = vmul.f32 %v695, %v835
      %v840 = vmul.f32 %v696, %v831
      %v841 = vmul.f32 %v697, %v835
      %842 = vst [vmem:[#allocation2 + $0x80] sm:$0xff] %v838
      %843 = vst [vmem:[#allocation2 + $0x88] sm:$0xff] %v839
      %844 = vst [vmem:[#allocation2 + $0x90] sm:$0xff] %v840
      %845 = vst [vmem:[#allocation2 + $0x98] sm:$0xff] %v841
      %846 = vrot.lane.b32.xlu0 %v694, 127
      %v847 = vpop.permute.xlu0 %846
      %848 = vrot.lane.b32.xlu0 %v696, 127
      %v849 = vpop.permute.xlu0 %848
      %850 = vrot.lane.b32.xlu0 %v695, 127
      %v851 = vpop.permute.xlu0 %850
      %852 = vrot.lane.b32.xlu0 %v697, 127
      %v853 = vpop.permute.xlu0 %852
      %v854 = vsel %vm422, %v847, %v851
      %v855 = vsel %vm422, %v849, %v853
      %v856 = vsel %vm422, %v851, %v847
      %v857 = vsel %vm422, %v853, %v849
      %v858 = vld [vmem:[%s427] ss:$8 sm:$0x3]
      %v860 = vlaneseq
      %v861 = vshrl.u32 %v860, 7
      %v862 = vsub.s32 0, %v861
      %v863 = vrot.slane %v858, %v862
      %v864 = vlaneseq
      %v865 = vshrl.u32 %v864, 7
      %v866 = vsub.s32 1, %v865
      %v867 = vrot.slane %v858, %v866
      %v870 = vmul.f32 %v854, %v863
      %v871 = vmul.f32 %v856, %v867
      %v872 = vmul.f32 %v855, %v863
      %v873 = vmul.f32 %v857, %v867
      %874 = vst [vmem:[#allocation2 + $0xa0] sm:$0xff] %v870
      %875 = vst [vmem:[#allocation2 + $0xa8] sm:$0xff] %v871
      %876 = vst [vmem:[#allocation2 + $0xb0] sm:$0xff] %v872
      %877 = vst [vmem:[#allocation2 + $0xb8] sm:$0xff] %v873
      %878 = vrot.lane.b32.xlu0 %v694, 113
      %v879 = vpop.permute.xlu0 %878
      %880 = vrot.lane.b32.xlu0 %v696, 113
      %v881 = vpop.permute.xlu0 %880
      %882 = vrot.lane.b32.xlu0 %v695, 113
      %v883 = vpop.permute.xlu0 %882
      %884 = vrot.lane.b32.xlu0 %v697, 113
      %v885 = vpop.permute.xlu0 %884
      %v886 = vsel %vm456, %v879, %v883
      %v887 = vsel %vm456, %v881, %v885
      %v888 = vsel %vm456, %v883, %v879
      %v889 = vsel %vm456, %v885, %v881
      %v890 = vld [vmem:[%s461] ss:$8 sm:$0x3]
      %v892 = vlaneseq
      %v893 = vshrl.u32 %v892, 7
      %v894 = vsub.s32 0, %v893
      %v895 = vrot.slane %v890, %v894
      %v896 = vlaneseq
      %v897 = vshrl.u32 %v896, 7
      %v898 = vsub.s32 1, %v897
      %v899 = vrot.slane %v890, %v898
      %v902 = vmul.f32 %v886, %v895
      %v903 = vmul.f32 %v888, %v899
      %v904 = vmul.f32 %v887, %v895
      %v905 = vmul.f32 %v889, %v899
      %906 = vst [vmem:[#allocation2 + $0xc0] sm:$0xff] %v902
      %907 = vst [vmem:[#allocation2 + $0xc8] sm:$0xff] %v903
      %908 = vst [vmem:[#allocation2 + $0xd0] sm:$0xff] %v904
      %909 = vst [vmem:[#allocation2 + $0xd8] sm:$0xff] %v905
      %910 = vrot.lane.b32.xlu0 %v694, 112
      %v911 = vpop.permute.xlu0 %910
      %912 = vrot.lane.b32.xlu0 %v696, 112
      %v913 = vpop.permute.xlu0 %912
      %914 = vrot.lane.b32.xlu0 %v695, 112
      %v915 = vpop.permute.xlu0 %914
      %916 = vrot.lane.b32.xlu0 %v697, 112
      %v917 = vpop.permute.xlu0 %916
      %v918 = vsel %vm490, %v911, %v915
      %v919 = vsel %vm490, %v913, %v917
      %v920 = vsel %vm490, %v915, %v911
      %v921 = vsel %vm490, %v917, %v913
      %v922 = vld [vmem:[%s495] ss:$8 sm:$0x3]
      %v924 = vlaneseq
      %v925 = vshrl.u32 %v924, 7
      %v926 = vsub.s32 0, %v925
      %v927 = vrot.slane %v922, %v926
      %v928 = vlaneseq
      %v929 = vshrl.u32 %v928, 7
      %v930 = vsub.s32 1, %v929
      %v931 = vrot.slane %v922, %v930
      %v934 = vmul.f32 %v918, %v927
      %v935 = vmul.f32 %v920, %v931
      %v936 = vmul.f32 %v919, %v927
      %v937 = vmul.f32 %v921, %v931
      %938 = vst [vmem:[#allocation2 + $0xe0] sm:$0xff] %v934
      %939 = vst [vmem:[#allocation2 + $0xe8] sm:$0xff] %v935
      %940 = vst [vmem:[#allocation2 + $0xf0] sm:$0xff] %v936
      %941 = vst [vmem:[#allocation2 + $0xf8] sm:$0xff] %v937
      %942 = vrot.lane.b32.xlu0 %v694, 111
      %v943 = vpop.permute.xlu0 %942
      %944 = vrot.lane.b32.xlu0 %v696, 111
      %v945 = vpop.permute.xlu0 %944
      %946 = vrot.lane.b32.xlu0 %v695, 111
      %v947 = vpop.permute.xlu0 %946
      %948 = vrot.lane.b32.xlu0 %v697, 111
      %v949 = vpop.permute.xlu0 %948
      %v950 = vsel %vm524, %v943, %v947
      %v951 = vsel %vm524, %v945, %v949
      %v952 = vsel %vm524, %v947, %v943
      %v953 = vsel %vm524, %v949, %v945
      %v954 = vld [vmem:[%s529] ss:$8 sm:$0x3]
      %v956 = vlaneseq
      %v957 = vshrl.u32 %v956, 7
      %v958 = vsub.s32 0, %v957
      %v959 = vrot.slane %v954, %v958
      %v960 = vlaneseq
      %v961 = vshrl.u32 %v960, 7
      %v962 = vsub.s32 1, %v961
      %v963 = vrot.slane %v954, %v962
      %v966 = vmul.f32 %v950, %v959
      %v967 = vmul.f32 %v952, %v963
      %v968 = vmul.f32 %v951, %v959
      %v969 = vmul.f32 %v953, %v963
      %970 = vst [vmem:[#allocation2 + $0x100] sm:$0xff] %v966
      %971 = vst [vmem:[#allocation2 + $0x108] sm:$0xff] %v967
      %972 = vst [vmem:[#allocation2 + $0x110] sm:$0xff] %v968
      %973 = vst [vmem:[#allocation2 + $0x118] sm:$0xff] %v969
      %v974 = vld [vmem:[%s4] sm:$0xff]
      %v975 = vld [vmem:[%s4 + $0x8] sm:$0xff]
      %v976 = vld [vmem:[%s4 + $0x10] sm:$0xff]
      %v977 = vld [vmem:[%s4 + $0x18] sm:$0xff]
      %v978 = vld [vmem:[#allocation2] sm:$0xff]
      %v979 = vld [vmem:[#allocation2 + $0x8] sm:$0xff]
      %v980 = vld [vmem:[#allocation2 + $0x10] sm:$0xff]
      %v981 = vld [vmem:[#allocation2 + $0x18] sm:$0xff]
      %v982 = vld [vmem:[#allocation2 + $0x20] sm:$0xff]
      %v983 = vld [vmem:[#allocation2 + $0x28] sm:$0xff]
      %v984 = vld [vmem:[#allocation2 + $0x30] sm:$0xff]
      %v985 = vld [vmem:[#allocation2 + $0x38] sm:$0xff]
      %v986 = vld [vmem:[#allocation2 + $0x40] sm:$0xff]
      %v987 = vld [vmem:[#allocation2 + $0x48] sm:$0xff]
      %v988 = vld [vmem:[#allocation2 + $0x50] sm:$0xff]
      %v989 = vld [vmem:[#allocation2 + $0x58] sm:$0xff]
      %v990 = vld [vmem:[#allocation2 + $0x60] sm:$0xff]
      %v991 = vld [vmem:[#allocation2 + $0x68] sm:$0xff]
      %v992 = vld [vmem:[#allocation2 + $0x70] sm:$0xff]
      %v993 = vld [vmem:[#allocation2 + $0x78] sm:$0xff]
      %v994 = vld [vmem:[#allocation2 + $0x80] sm:$0xff]
      %v995 = vld [vmem:[#allocation2 + $0x88] sm:$0xff]
      %v996 = vld [vmem:[#allocation2 + $0x90] sm:$0xff]
      %v997 = vld [vmem:[#allocation2 + $0x98] sm:$0xff]
      %v998 = vld [vmem:[#allocation2 + $0xa0] sm:$0xff]
      %v999 = vld [vmem:[#allocation2 + $0xa8] sm:$0xff]
      %v1000 = vld [vmem:[#allocation2 + $0xb0] sm:$0xff]
      %v1001 = vld [vmem:[#allocation2 + $0xb8] sm:$0xff]
      %v1002 = vld [vmem:[#allocation2 + $0xc0] sm:$0xff]
      %v1003 = vld [vmem:[#allocation2 + $0xc8] sm:$0xff]
      %v1004 = vld [vmem:[#allocation2 + $0xd0] sm:$0xff]
      %v1005 = vld [vmem:[#allocation2 + $0xd8] sm:$0xff]
      %v1006 = vld [vmem:[#allocation2 + $0xe0] sm:$0xff]
      %v1007 = vld [vmem:[#allocation2 + $0xe8] sm:$0xff]
      %v1008 = vld [vmem:[#allocation2 + $0xf0] sm:$0xff]
      %v1009 = vld [vmem:[#allocation2 + $0xf8] sm:$0xff]
      %v1010 = vld [vmem:[#allocation2 + $0x100] sm:$0xff]
      %v1011 = vld [vmem:[#allocation2 + $0x108] sm:$0xff]
      %v1012 = vld [vmem:[#allocation2 + $0x110] sm:$0xff]
      %v1013 = vld [vmem:[#allocation2 + $0x118] sm:$0xff]
      %v1014 = vld [vmem:[%s5] sm:$0xff]
      %v1015 = vld [vmem:[%s5 + $0x8] sm:$0xff]
      %1017 = vset.pattern.permute.xlu0 0
      %1018 = vperm.xlu0 %1017, %v1014
      %v1019 = vpop.permute.xlu0 %1018
      %1022 = vset.pattern.permute.xlu0 0
      %1023 = vperm.xlu0 %1022, %v1015
      %v1024 = vpop.permute.xlu0 %1023
      %v1027 = vsel %vm602, %v975, 0
      %v1030 = vsel %vm602, %v977, 0
      %1032 = vmatprep.subr.mxu0 %v979
      %1033 = vmatpush1.msra.mxu0 %v978
      %1034 = vmatprep.subr.mxu0 %v981
      %1035 = vmatpush1.msra.mxu0 %v980
      %1036 = vmatprep.subr.mxu0 %v983
      %1037 = vmatpush1.msra.mxu0 %v982
      %1038 = vmatprep.subr.mxu0 %v985
      %1039 = vmatpush1.msra.mxu0 %v984
      %1040 = vmatprep.subr.mxu0 %v987
      %1041 = vmatpush1.msra.mxu0 %v986
      %1042 = vmatprep.subr.mxu0 %v989
      %1043 = vmatpush1.msra.mxu0 %v988
      %1044 = vmatprep.subr.mxu0 %v991
      %1045 = vmatpush1.msra.mxu0 %v990
      %1046 = vmatprep.subr.mxu0 %v993
      %1047 = vmatpush1.msra.mxu0 %v992
      %1048 = vmatprep.subr.mxu0 %v995
      %1049 = vmatpush1.msra.mxu0 %v994
      %1050 = vmatprep.subr.mxu0 %v997
      %1051 = vmatpush1.msra.mxu0 %v996
      %1052 = vmatprep.subr.mxu0 %v999
      %1053 = vmatpush1.msra.mxu0 %v998
      %1054 = vmatprep.subr.mxu0 %v1001
      %1055 = vmatpush1.msra.mxu0 %v1000
      %1056 = vmatprep.subr.mxu0 %v1003
      %1057 = vmatpush1.msra.mxu0 %v1002
      %1058 = vmatprep.subr.mxu0 %v1005
      %1059 = vmatpush1.msra.mxu0 %v1004
      %1060 = vmatprep.subr.mxu0 %v1007
      %1061 = vmatpush1.msra.mxu0 %v1006
      %1062 = vmatprep.subr.mxu0 %v1009
      %1063 = vmatpush1.msra.mxu0 %v1008
      %1064 = vmatprep.subr.mxu0 %v1011
      %1065 = vmatpush1.msra.mxu0 %v1010
      %1066 = vmatprep.subr.mxu0 %v1013
      %1067 = vmatpush1.msra.mxu0 %v1012
      %1068 = vmatprep.subr.mxu0 0.0
      %1069 = vmatpush1.msra.mxu0 0.0
      %1070 = vmatprep.subr.mxu0 0.0
      %1071 = vmatpush1.msra.mxu0 0.0
      %1072 = vmatprep.subr.mxu0 0.0
      %1073 = vmatpush1.msra.mxu0 0.0
      %1074 = vmatprep.subr.mxu0 0.0
      %1075 = vmatpush1.msra.mxu0 0.0
      %1076 = vmatprep.subr.mxu0 0.0
      %1077 = vmatpush1.msra.mxu0 0.0
      %1078 = vmatprep.subr.mxu0 0.0
      %1079 = vmatpush1.msra.mxu0 0.0
      %1080 = vmatprep.subr.mxu0 0.0
      %1081 = vmatpush1.msra.mxu0 0.0
      %1082 = vmatprep.subr.mxu0 0.0
      %1083 = vmatpush1.msra.mxu0 0.0
      %1084 = vmatprep.subr.mxu0 0.0
      %1085 = vmatpush1.msra.mxu0 0.0
      %1086 = vmatprep.subr.mxu0 0.0
      %1087 = vmatpush1.msra.mxu0 0.0
      %1088 = vmatprep.subr.mxu0 0.0
      %1089 = vmatpush1.msra.mxu0 0.0
      %1090 = vmatprep.subr.mxu0 0.0
      %1091 = vmatpush1.msra.mxu0 0.0
      %1092 = vmatprep.subr.mxu0 0.0
      %1093 = vmatpush1.msra.mxu0 0.0
      %1094 = vmatprep.subr.mxu0 0.0
      %1095 = vmatpush1.msra.mxu0 0.0
      %1096 = vmatprep.mubr.f32.mxu0 %v1027
      %1097 = vmatmul.mubr.f32.gmra.mrb[0].mxu0 %v974
      %v1098 = vpop.f32.mrb[0].mxu0
      %v1099 = vadd.f32 %v1019, %v1098
      %v1100 = vpop.f32.mrb[0].mxu0
      %v1101 = vadd.f32 %v1019, %v1100
      %1102 = vmatprep.mubr.f32.mxu0 %v1030
      %1103 = vmatmul.mubr.f32.gmra.mrb[0].mxu0 %v976
      %v1104 = vpop.f32.mrb[0].mxu0
      %v1105 = vadd.f32 %v1024, %v1104
      %v1106 = vpop.f32.mrb[0].mxu0
      %v1107 = vadd.f32 %v1024, %v1106
      %1108 = vdwg.mxu0
      %v1109 = vadd.f32 %v1099, %v252
      %v1110 = vadd.f32 %v1101, %v253
      %v1111 = vadd.f32 %v1105, %v254
      %v1112 = vadd.f32 %v1107, %v255
      %vm1113 = vcmp.ge.f32.partialorder %v1109, 0.0
      %vm1114 = vcmp.ge.f32.partialorder %v1110, 0.0
      %vm1115 = vcmp.ge.f32.partialorder %v1111, 0.0
      %vm1116 = vcmp.ge.f32.partialorder %v1112, 0.0
      %v1117 = vmul.f32 %v1109, 0.3
      %v1118 = vmul.f32 %v1110, 0.3
      %v1119 = vmul.f32 %v1111, 0.3
      %v1120 = vmul.f32 %v1112, 0.3
      %v1121 = vsel %vm1113, %v1109, %v1117
      %v1122 = vsel %vm1114, %v1110, %v1118
      %v1123 = vsel %vm1115, %v1111, %v1119
      %v1124 = vsel %vm1116, %v1112, %v1120
      %1125 = vst [vmem:[%s251] sm:$0xff] %v1121
      %1126 = vst [vmem:[%s251 + $0x8] sm:$0xff] %v1122
      %1127 = vst [vmem:[%s251 + $0x10] sm:$0xff] %v1123
      %1128 = vst [vmem:[%s251 + $0x18] sm:$0xff] %v1124
      %p1129 = scmp.lt.s32.totalorder %s17, 1
      %s1130 = scalar_select %p1129, %s17, 1
      %s1131 = smul.addr %s1130, 4
      %s1132 = smul.addr %s1131, 8
      %s1133 = scalar_lea.vmem %s6, %s1132
      // Predicated region
      $region45: #{residual_block_forward.1} parent=43 // pred_check
        %p1134 = pneg %p166
      $region46: #{residual_block_forward.1} parent=43 // pred_check_branch
        %1136 = sbr.rel (%p1134) target = $region48
      $region47: #{residual_block_forward.1} parent=43 // pred_region
        _
      $region48: #{residual_block_forward.1} parent=43 // pred_fallthru
        _
    $region44: #{residual_block_forward.1} parent=5 // pred_fallthru
      _
    %p1137 = scmp.le.s32.totalorder 2, %s12
    // Predicated region
    $region49: #{residual_block_forward.1} parent=5 // pred_check
      %p1138 = pneg %p1137
    $region50: #{residual_block_forward.1} parent=5 // pred_check_branch
      %1140 = sbr.rel (%p1138) target = $region52
    $region51: #{residual_block_forward.1} parent=5 // pred_region
      %s1141 = ssub.s32 %s12, 2
      // Predicated region
      $region53: #{residual_block_forward.1} parent=51 // pred_check
        %p1142 = pneg %p172
      $region54: #{residual_block_forward.1} parent=51 // pred_check_branch
        %1144 = sbr.rel (%p1142) target = $region56
      $region55: #{residual_block_forward.1} parent=51 // pred_region
        %p1145 = scmp.lt.s32.totalorder %s18, 1
        %s1146 = scalar_select %p1145, %s18, 1
        %s1147 = smul.addr %s1146, 4
        %s1148 = smul.addr %s1147, 8
        %s1149 = scalar_lea.vmem %s6, %s1148
      $region56: #{residual_block_forward.1} parent=51 // pred_fallthru
        _
    $region52: #{residual_block_forward.1} parent=5 // pred_fallthru
      _
  $region6: #{residual_block_forward.1} parent=0 // loop_footer
    %s16 = sadd.s32 1, %s12
  $region7: #{residual_block_forward.1} parent=0 // loop_footer_branch
    %11 = sbr.rel target = $region3
  $region8: #{residual_block_forward.1} parent=0 // loop_exit
    _

</llo_original>
